<compile_context>
chip_gen: v7x
topology: tpu7x:2x2x1
jax: 0.10.0
libtpu: 0.0.40
codegen_flags: <defaults>
</compile_context>

<pallas_src>
import functools

import jax
import jax.numpy as jnp
from jax.experimental import pallas as pl
from jax.experimental.pallas import tpu as pltpu


# ----------------------------------------------------------------------------
# Small helpers
# ----------------------------------------------------------------------------
def _round_up(x, m):
    return ((x + m - 1) // m) * m


def _pick_tile(dim, candidates):
    for c in candidates:
        if dim % c == 0:
            return c
    return dim


def _choose_tm(m, max_tm=2048, split_min=1024):
    """Return (tm, m_pad).

    Prefers tm that exactly divides M (multiple of 16) so no activation pad is
    needed, and >=2 M blocks when M is large enough (keeps both v7x cores busy).
    """
    if m <= max_tm:
        m_pad = _round_up(m, 16)
        if m_pad == m and m >= split_min and (m // 2) % 16 == 0:
            return m // 2, m            # 2 blocks -> feeds both v7x TensorCores
        return m_pad, m_pad             # single tile (pad tiny/ragged M only)
    t = max_tm - (max_tm % 16)
    while t >= 256:
        if m % t == 0:
            return t, m                 # exact divisor: no jnp.pad round-trip
        t -= 16
    return max_tm, _round_up(m, max_tm)  # fallback: pad


def _single_k_fits(tm, k, tn, out_bytes, budget=20 * 1024 * 1024):
    # Double-buffered x/w/out tiles + bias; sized to stay well inside the
    # 32 MiB scoped limit (and v7x's 64 MiB physical VMEM per core).
    need = 2 * (tm * k * 2) + 2 * (k * tn * 2) + 2 * (tm * tn * out_bytes) + 2 * tn * 4
    return need <= budget


# ----------------------------------------------------------------------------
# Pallas kernels: out = relu?(x @ w + b)
# ----------------------------------------------------------------------------
def _matmul_bias_act_kernel_single_k(x_ref, w_ref, b_ref, o_ref, *, apply_relu):
    # Full K in one tile: no accumulator scratch, direct store.
    out = jnp.dot(x_ref[...], w_ref[...], preferred_element_type=jnp.float32)
    out = out + b_ref[...]                    # b is (1, tn) -> broadcasts
    if apply_relu:
        out = jnp.maximum(out, 0.0)
    o_ref[...] = out.astype(o_ref.dtype)


def _matmul_bias_act_kernel_multi_k(x_ref, w_ref, b_ref, o_ref, acc_ref, *,
                                    apply_relu):
    k = pl.program_id(2)

    @pl.when(k == 0)
    def _():
        acc_ref[...] = jnp.zeros_like(acc_ref)

    acc_ref[...] += jnp.dot(x_ref[...], w_ref[...],
                            preferred_element_type=jnp.float32)

    @pl.when(k == pl.num_programs(2) - 1)
    def _():
        out = acc_ref[...] + b_ref[...]
        if apply_relu:
            out = jnp.maximum(out, 0.0)
        o_ref[...] = out.astype(o_ref.dtype)


def matmul_bias_act(x, w, b, *, n_out, relu, out_dtype=jnp.bfloat16):
    """out = act(x @ w + b)[:, :n_out].

    x: (M, K) float/bf16.  w: (K, N_pad) bf16, N_pad % 128 == 0, zero columns
    beyond n_out.  b: (1, N_pad) f32.  Returns (M, n_out) in out_dtype.
    """
    M, K = x.shape
    Kw, N_pad = w.shape
    assert K == Kw and N_pad % 128 == 0 and n_out <= N_pad

    out_bytes = jnp.dtype(out_dtype).itemsize
    tn = 256 if N_pad % 256 == 0 else 128
    tm, M_pad = _choose_tm(M)

    xb = x.astype(jnp.bfloat16)
    if M_pad != M:
        xb = jnp.pad(xb, ((0, M_pad - M), (0, 0)))

    vmem_params = pltpu.CompilerParams(
        dimension_semantics=("parallel", "parallel"),
        vmem_limit_bytes=32 * 1024 * 1024,
    )

    if _single_k_fits(tm, K, tn, out_bytes):
        grid = (M_pad // tm, N_pad // tn)
        flops = 2 * M_pad * N_pad * K
        bytes_accessed = (2 * M_pad * K + 2 * K * N_pad + 4 * N_pad
                          + out_bytes * M_pad * N_pad)
        out = pl.pallas_call(
            functools.partial(_matmul_bias_act_kernel_single_k,
                              apply_relu=relu),
            out_shape=jax.ShapeDtypeStruct((M_pad, N_pad), out_dtype),
            grid_spec=pltpu.PrefetchScalarGridSpec(
                num_scalar_prefetch=0,
                grid=grid,
                in_specs=[
                    pl.BlockSpec((tm, K), lambda i, j: (i, 0)),
                    pl.BlockSpec((K, tn), lambda i, j: (0, j)),
                    pl.BlockSpec((1, tn), lambda i, j: (0, j)),
                ],
                out_specs=pl.BlockSpec((tm, tn), lambda i, j: (i, j)),
            ),
            compiler_params=vmem_params,
            cost_estimate=pl.CostEstimate(
                flops=flops, transcendentals=0, bytes_accessed=bytes_accessed),
        )(xb, w, b)
    else:
        # Generic multi-K fallback (not hit by DQN shapes): 128-aligned K,
        # f32 accumulator scratch, reduction axis marked "arbitrary".
        K_pad = _round_up(K, 128)
        if K_pad != K:
            xb = jnp.pad(xb, ((0, 0), (0, K_pad - K)))
            w = jnp.pad(w, ((0, K_pad - K), (0, 0)))
        tk = _pick_tile(K_pad, (1024, 512, 256, 128))
        grid = (M_pad // tm, N_pad // tn, K_pad // tk)
        out = pl.pallas_call(
            functools.partial(_matmul_bias_act_kernel_multi_k,
                              apply_relu=relu),
            out_shape=jax.ShapeDtypeStruct((M_pad, N_pad), out_dtype),
            grid_spec=pltpu.PrefetchScalarGridSpec(
                num_scalar_prefetch=0,
                grid=grid,
                in_specs=[
                    pl.BlockSpec((tm, tk), lambda i, j, k: (i, k)),
                    pl.BlockSpec((tk, tn), lambda i, j, k: (k, j)),
                    pl.BlockSpec((1, tn), lambda i, j, k: (0, j)),
                ],
                out_specs=pl.BlockSpec((tm, tn), lambda i, j, k: (i, j)),
                scratch_shapes=[pltpu.VMEM((tm, tn), jnp.float32)],
            ),
            compiler_params=pltpu.CompilerParams(
                dimension_semantics=("parallel", "parallel", "arbitrary"),
                vmem_limit_bytes=32 * 1024 * 1024,
            ),
        )(xb, w, b)

    return out[:M, :n_out]


# ----------------------------------------------------------------------------
# im2col glue (plain JAX, channels-last): NHWC -> (N*OH*OW, Kh*Kw*C)
# ----------------------------------------------------------------------------
# TODO(synk): fuse patch extraction (im2col) into the Pallas matmul kernel to
# avoid materializing duplicated patches in HBM.
def im2col_nhwc(x, kh, kw, stride):
    n, h, w, c = x.shape
    oh = (h - kh) // stride + 1
    ow = (w - kw) // stride + 1
    patches = []
    for i in range(kh):
        for j in range(kw):
            patches.append(
                x[:, i:i + stride * oh:stride, j:j + stride * ow:stride, :])
    p = jnp.stack(patches, axis=3)                 # (N, OH, OW, Kh*Kw, C)
    return p.reshape(n * oh * ow, kh * kw * c), oh, ow


def conv2d_pallas(x_nhwc, w, b, *, kh, kw, stride, cout, relu):
    """Conv2d (valid padding, PyTorch semantics) via im2col + Pallas matmul.

    x_nhwc: (N, H, W, Cin); w: flattened (Kh*Kw*Cin, N_pad) bf16 weight;
    returns NHWC (N, OH, OW, cout) bf16.
    """
    n = x_nhwc.shape[0]
    patches, oh, ow = im2col_nhwc(x_nhwc.astype(jnp.bfloat16), kh, kw, stride)
    out = matmul_bias_act(patches, w, b, n_out=cout, relu=relu,
                          out_dtype=jnp.bfloat16)
    return out.reshape(n, oh, ow, cout)


# ----------------------------------------------------------------------------
# Parameter init (PyTorch layout) and one-time layout preparation
# ----------------------------------------------------------------------------
def dqn_init(key, input_shape, n_actions):
    c_in = input_shape[0]
    ks = jax.random.split(key, 10)

    def u(k, shape, fan_in):
        bound = 1.0 / jnp.sqrt(fan_in)
        return jax.random.uniform(k, shape, jnp.float32, -bound, bound)

    params = {
        "c1_w": u(ks[0], (32, c_in, 8, 8), c_in * 8 * 8),
        "c1_b": u(ks[1], (32,), c_in * 8 * 8),
        "c2_w": u(ks[2], (64, 32, 4, 4), 32 * 4 * 4),
        "c2_b": u(ks[3], (64,), 32 * 4 * 4),
        "c3_w": u(ks[4], (64, 64, 3, 3), 64 * 3 * 3),
        "c3_b": u(ks[5], (64,), 64 * 3 * 3),
    }
    h, w = input_shape[1], input_shape[2]
    o1 = ((h - 8) // 4 + 1, (w - 8) // 4 + 1)
    o2 = ((o1[0] - 4) // 2 + 1, (o1[1] - 4) // 2 + 1)
    o3 = ((o2[0] - 3) // 1 + 1, (o2[1] - 3) // 1 + 1)
    conv_out_size = 64 * o3[0] * o3[1]
    params["fc1_w"] = u(ks[6], (512, conv_out_size), conv_out_size)
    params["fc1_b"] = u(ks[7], (512,), conv_out_size)
    params["fc2_w"] = u(ks[8], (n_actions, 512), 512)
    params["fc2_b"] = u(ks[9], (n_actions,), 512)
    return params


def dqn_prepare(params, input_shape):
    """One-time conversion of PyTorch-layout params to Pallas-friendly layouts:
    flattened K-major weights, bf16, N padded to a multiple of 128 (K is left
    un-padded; the kernel uses full-K blocks)."""

    def pad_wb(w_kn, b_n):
        _, N = w_kn.shape
        N_pad = _round_up(N, 128)
        w_p = jnp.pad(w_kn, ((0, 0), (0, N_pad - N))).astype(jnp.bfloat16)
        b_p = jnp.pad(b_n, (0, N_pad - N)).reshape(1, N_pad).astype(jnp.float32)
        return w_p, b_p

    prep = {}
    for name in ("c1", "c2", "c3"):
        w = params[f"{name}_w"]                       # (Cout, Cin, Kh, Kw)
        cout, cin, kh, kw = w.shape
        w_kn = w.transpose(2, 3, 1, 0).reshape(kh * kw * cin, cout)
        prep[f"{name}_w"], prep[f"{name}_b"] = pad_wb(w_kn, params[f"{name}_b"])

    # conv output spatial size, needed to permute fc1 columns from NCHW-flatten
    # order (c, h, w) to our NHWC-flatten order (h, w, c).
    h, w = input_shape[1], input_shape[2]
    o1 = ((h - 8) // 4 + 1, (w - 8) // 4 + 1)
    o2 = ((o1[0] - 4) // 2 + 1, (o1[1] - 4) // 2 + 1)
    o3 = ((o2[0] - 3) // 1 + 1, (o2[1] - 3) // 1 + 1)

    fc1_w = params["fc1_w"]                           # (512, 64*o3h*o3w)
    fc1_w = fc1_w.reshape(512, 64, o3[0], o3[1]).transpose(0, 2, 3, 1)
    fc1_w = fc1_w.reshape(512, -1).T                  # (K, 512), rows (h, w, c)
    prep["fc1_w"], prep["fc1_b"] = pad_wb(fc1_w, params["fc1_b"])

    fc2_w = params["fc2_w"].T                         # (512, n_actions)
    prep["fc2_w"], prep["fc2_b"] = pad_wb(fc2_w, params["fc2_b"])
    return prep


# ----------------------------------------------------------------------------
# DQN forward (Pallas) — external API keeps PyTorch's NCHW input convention
# ----------------------------------------------------------------------------
def dqn_forward_pallas(prep, x, *, n_actions):
    xh = jnp.transpose(x, (0, 2, 3, 1))               # NCHW -> NHWC, once
    h = conv2d_pallas(xh, prep["c1_w"], prep["c1_b"],
                      kh=8, kw=8, stride=4, cout=32, relu=True)
    h = conv2d_pallas(h, prep["c2_w"], prep["c2_b"],
                      kh=4, kw=4, stride=2, cout=64, relu=True)
    h = conv2d_pallas(h, prep["c3_w"], prep["c3_b"],
                      kh=3, kw=3, stride=1, cout=64, relu=True)
    flat = h.reshape(x.shape[0], -1)                  # fc1_w rows pre-permuted to match
    h = matmul_bias_act(flat, prep["fc1_w"], prep["fc1_b"], n_out=512,
                        relu=True, out_dtype=jnp.bfloat16)
    q = matmul_bias_act(h, prep["fc2_w"], prep["fc2_b"], n_out=n_actions,
                        relu=False, out_dtype=jnp.float32)
    return q


# ----------------------------------------------------------------------------
# Pure-JAX f32 reference (PyTorch semantics) for correctness check
# ----------------------------------------------------------------------------
def dqn_forward_ref(params, x):
    def conv(x, w, b, s):
        y = jax.lax.conv_general_dilated(
            x, w, window_strides=(s, s), padding="VALID",
            dimension_numbers=("NCHW", "OIHW", "NCHW"))
        return jax.nn.relu(y + b.reshape(1, -1, 1, 1))

    h = conv(x, params["c1_w"], params["c1_b"], 4)
    h = conv(h, params["c2_w"], params["c2_b"], 2)
    h = conv(h, params["c3_w"], params["c3_b"], 1)
    flat = h.reshape(x.shape[0], -1)
    h = jax.nn.relu(flat @ params["fc1_w"].T + params["fc1_b"])
    return h @ params["fc2_w"].T + params["fc2_b"]


if __name__ == "__main__":
    n_actions = 6
    root_key = jax.random.PRNGKey(0)

    def run_case(batch, channels, spatial, case_id):
        input_shape = (channels, spatial, spatial)
        key = jax.random.fold_in(root_key, case_id)
        k_params, k_x = jax.random.split(key)
        params = dqn_init(k_params, input_shape, n_actions)
        prep = dqn_prepare(params, input_shape)
        x = jax.random.normal(k_x, (batch, channels, spatial, spatial), jnp.float32)

        fwd = jax.jit(functools.partial(dqn_forward_pallas, n_actions=n_actions))
        q = jax.block_until_ready(fwd(prep, x))
        q_ref = dqn_forward_ref(params, x)

        assert q.shape == (batch, n_actions)
        # bf16 MXU inputs / bf16 intermediates (f32 accumulation) => relaxed
        # tolerance vs the f32 reference.
        err = float(jnp.max(jnp.abs(q - q_ref)))
        assert jnp.allclose(q, q_ref, atol=1e-2, rtol=1e-2), f"max abs err {err}"

    # Minimal valid spatial size for the 8/4 -> 4/2 -> 3/1 conv chain.
    run_case(batch=2, channels=4, spatial=36, case_id=0)
    # Atari-sized shapes: exercises the multi-block (M, N) tiled grid path.
    run_case(batch=32, channels=4, spatial=84, case_id=1)

    print("KERNEL_OK")
</pallas_src>

<mosaic_0001>
module attributes {stable_mosaic.version = 11 : i64} {
  func.func @_matmul_bias_act_kernel_single_k(%arg0: i32, %arg1: i32, %arg2: memref<128x256xbf16, #tpu.memory_space<vmem>>, %arg3: memref<256x128xbf16, #tpu.memory_space<vmem>>, %arg4: memref<1x128xf32, #tpu.memory_space<vmem>>, %arg5: memref<128x128xbf16, #tpu.memory_space<vmem>>) attributes {dimension_semantics = [#tpu.dimension_semantics<parallel>, #tpu.dimension_semantics<parallel>], iteration_bounds = array<i64: 1, 1>, scalar_prefetch = 0 : i64, scratch_operands = 0 : i64, tpu.core_type = #tpu.core_type<tc>, window_params = [{transform_indices = @transform_0, window_bounds = array<i64: 128, 256>}, {transform_indices = @transform_1, window_bounds = array<i64: 256, 128>}, {transform_indices = @transform_2, window_bounds = array<i64: 1, 128>}, {transform_indices = @transform_3, window_bounds = array<i64: 128, 128>}]} {
    %c0 = arith.constant 0 : index
    %c0_0 = arith.constant 0 : index
    %0 = vector.load %arg2[%c0, %c0_0] : memref<128x256xbf16, #tpu.memory_space<vmem>>, vector<128x256xbf16>
    %c0_1 = arith.constant 0 : index
    %c0_2 = arith.constant 0 : index
    %1 = vector.load %arg3[%c0_1, %c0_2] : memref<256x128xbf16, #tpu.memory_space<vmem>>, vector<256x128xbf16>
    %cst = arith.constant dense<0.000000e+00> : vector<128x128xf32>
    %2 = tpu.matmul %0, %1, %cst {dimension_numbers = #tpu.dot_dimension_numbers<[1], [0], [0], [1], [0, 0, 1, 1], [], []>} : vector<128x256xbf16>, vector<256x128xbf16>, vector<128x128xf32> -> vector<128x128xf32>
    %c0_3 = arith.constant 0 : index
    %c0_4 = arith.constant 0 : index
    %3 = vector.load %arg4[%c0_3, %c0_4] : memref<1x128xf32, #tpu.memory_space<vmem>>, vector<1x128xf32>
    %4 = vector.broadcast %3 : vector<1x128xf32> to vector<128x128xf32>
    %5 = arith.addf %2, %4 : vector<128x128xf32>
    %cst_5 = arith.constant 0.000000e+00 : f32
    %6 = vector.broadcast %cst_5 : f32 to vector<128x128xf32>
    %7 = arith.maximumf %5, %6 : vector<128x128xf32>
    %8 = arith.truncf %7 : vector<128x128xf32> to vector<128x128xbf16>
    %c0_6 = arith.constant 0 : index
    %c0_7 = arith.constant 0 : index
    %9 = vector.load %arg5[%c0_6, %c0_7] : memref<128x128xbf16, #tpu.memory_space<vmem>>, vector<128x128xbf16>
    tpu.vector_store %arg5[%c0_6, %c0_7], %8 {strides = array<i32>} : memref<128x128xbf16, #tpu.memory_space<vmem>>, vector<128x128xbf16>,
    return
  }
  func.func @transform_0(%arg0: i32, %arg1: i32) -> (i32, i32) {
    %c0_i32 = arith.constant 0 : i32
    %c0_i32_0 = arith.constant 0 : i32
    return %arg0, %c0_i32 : i32, i32
  }
  func.func @transform_1(%arg0: i32, %arg1: i32) -> (i32, i32) {
    %c0_i32 = arith.constant 0 : i32
    %c0_i32_0 = arith.constant 0 : i32
    return %c0_i32, %arg1 : i32, i32
  }
  func.func @transform_2(%arg0: i32, %arg1: i32) -> (i32, i32) {
    %c0_i32 = arith.constant 0 : i32
    %c0_i32_0 = arith.constant 0 : i32
    return %c0_i32, %arg1 : i32, i32
  }
  func.func @transform_3(%arg0: i32, %arg1: i32) -> (i32, i32) {
    %c0_i32 = arith.constant 0 : i32
    return %arg0, %arg1 : i32, i32
  }
}

module attributes {stable_mosaic.version = 11 : i64} {
  func.func @_matmul_bias_act_kernel_single_k(%arg0: i32, %arg1: i32, %arg2: memref<32x512xbf16, #tpu.memory_space<vmem>>, %arg3: memref<512x128xbf16, #tpu.memory_space<vmem>>, %arg4: memref<1x128xf32, #tpu.memory_space<vmem>>, %arg5: memref<32x128xbf16, #tpu.memory_space<vmem>>) attributes {dimension_semantics = [#tpu.dimension_semantics<parallel>, #tpu.dimension_semantics<parallel>], iteration_bounds = array<i64: 1, 1>, scalar_prefetch = 0 : i64, scratch_operands = 0 : i64, tpu.core_type = #tpu.core_type<tc>, window_params = [{transform_indices = @transform_0, window_bounds = array<i64: 32, 512>}, {transform_indices = @transform_1, window_bounds = array<i64: 512, 128>}, {transform_indices = @transform_2, window_bounds = array<i64: 1, 128>}, {transform_indices = @transform_3, window_bounds = array<i64: 32, 128>}]} {
    %c0 = arith.constant 0 : index
    %c0_0 = arith.constant 0 : index
    %0 = vector.load %arg2[%c0, %c0_0] : memref<32x512xbf16, #tpu.memory_space<vmem>>, vector<32x512xbf16>
    %c0_1 = arith.constant 0 : index
    %c0_2 = arith.constant 0 : index
    %1 = vector.load %arg3[%c0_1, %c0_2] : memref<512x128xbf16, #tpu.memory_space<vmem>>, vector<512x128xbf16>
    %cst = arith.constant dense<0.000000e+00> : vector<32x128xf32>
    %2 = tpu.matmul %0, %1, %cst {dimension_numbers = #tpu.dot_dimension_numbers<[1], [0], [0], [1], [0, 0, 1, 1], [], []>} : vector<32x512xbf16>, vector<512x128xbf16>, vector<32x128xf32> -> vector<32x128xf32>
    %c0_3 = arith.constant 0 : index
    %c0_4 = arith.constant 0 : index
    %3 = vector.load %arg4[%c0_3, %c0_4] : memref<1x128xf32, #tpu.memory_space<vmem>>, vector<1x128xf32>
    %4 = vector.broadcast %3 : vector<1x128xf32> to vector<32x128xf32>
    %5 = arith.addf %2, %4 : vector<32x128xf32>
    %cst_5 = arith.constant 0.000000e+00 : f32
    %6 = vector.broadcast %cst_5 : f32 to vector<32x128xf32>
    %7 = arith.maximumf %5, %6 : vector<32x128xf32>
    %8 = arith.truncf %7 : vector<32x128xf32> to vector<32x128xbf16>
    %c0_6 = arith.constant 0 : index
    %c0_7 = arith.constant 0 : index
    %9 = vector.load %arg5[%c0_6, %c0_7] : memref<32x128xbf16, #tpu.memory_space<vmem>>, vector<32x128xbf16>
    tpu.vector_store %arg5[%c0_6, %c0_7], %8 {strides = array<i32>} : memref<32x128xbf16, #tpu.memory_space<vmem>>, vector<32x128xbf16>,
    return
  }
  func.func @transform_0(%arg0: i32, %arg1: i32) -> (i32, i32) {
    %c0_i32 = arith.constant 0 : i32
    %c0_i32_0 = arith.constant 0 : i32
    return %arg0, %c0_i32 : i32, i32
  }
  func.func @transform_1(%arg0: i32, %arg1: i32) -> (i32, i32) {
    %c0_i32 = arith.constant 0 : i32
    %c0_i32_0 = arith.constant 0 : i32
    return %c0_i32, %arg1 : i32, i32
  }
  func.func @transform_2(%arg0: i32, %arg1: i32) -> (i32, i32) {
    %c0_i32 = arith.constant 0 : i32
    %c0_i32_0 = arith.constant 0 : i32
    return %c0_i32, %arg1 : i32, i32
  }
  func.func @transform_3(%arg0: i32, %arg1: i32) -> (i32, i32) {
    %c0_i32 = arith.constant 0 : i32
    return %arg0, %arg1 : i32, i32
  }
}

module attributes {stable_mosaic.version = 11 : i64} {
  func.func @_matmul_bias_act_kernel_single_k(%arg0: i32, %arg1: i32, %arg2: memref<16x576xbf16, #tpu.memory_space<vmem>>, %arg3: memref<576x128xbf16, #tpu.memory_space<vmem>>, %arg4: memref<1x128xf32, #tpu.memory_space<vmem>>, %arg5: memref<16x128xbf16, #tpu.memory_space<vmem>>) attributes {dimension_semantics = [#tpu.dimension_semantics<parallel>, #tpu.dimension_semantics<parallel>], iteration_bounds = array<i64: 1, 1>, scalar_prefetch = 0 : i64, scratch_operands = 0 : i64, tpu.core_type = #tpu.core_type<tc>, window_params = [{transform_indices = @transform_0, window_bounds = array<i64: 16, 576>}, {transform_indices = @transform_1, window_bounds = array<i64: 576, 128>}, {transform_indices = @transform_2, window_bounds = array<i64: 1, 128>}, {transform_indices = @transform_3, window_bounds = array<i64: 16, 128>}]} {
    %c0 = arith.constant 0 : index
    %c0_0 = arith.constant 0 : index
    %0 = vector.load %arg2[%c0, %c0_0] : memref<16x576xbf16, #tpu.memory_space<vmem>>, vector<16x576xbf16>
    %c0_1 = arith.constant 0 : index
    %c0_2 = arith.constant 0 : index
    %1 = vector.load %arg3[%c0_1, %c0_2] : memref<576x128xbf16, #tpu.memory_space<vmem>>, vector<576x128xbf16>
    %cst = arith.constant dense<0.000000e+00> : vector<16x128xf32>
    %2 = tpu.matmul %0, %1, %cst {dimension_numbers = #tpu.dot_dimension_numbers<[1], [0], [0], [1], [0, 0, 1, 1], [], []>} : vector<16x576xbf16>, vector<576x128xbf16>, vector<16x128xf32> -> vector<16x128xf32>
    %c0_3 = arith.constant 0 : index
    %c0_4 = arith.constant 0 : index
    %3 = vector.load %arg4[%c0_3, %c0_4] : memref<1x128xf32, #tpu.memory_space<vmem>>, vector<1x128xf32>
    %4 = vector.broadcast %3 : vector<1x128xf32> to vector<16x128xf32>
    %5 = arith.addf %2, %4 : vector<16x128xf32>
    %cst_5 = arith.constant 0.000000e+00 : f32
    %6 = vector.broadcast %cst_5 : f32 to vector<16x128xf32>
    %7 = arith.maximumf %5, %6 : vector<16x128xf32>
    %8 = arith.truncf %7 : vector<16x128xf32> to vector<16x128xbf16>
    %c0_6 = arith.constant 0 : index
    %c0_7 = arith.constant 0 : index
    %9 = vector.load %arg5[%c0_6, %c0_7] : memref<16x128xbf16, #tpu.memory_space<vmem>>, vector<16x128xbf16>
    tpu.vector_store %arg5[%c0_6, %c0_7], %8 {strides = array<i32>} : memref<16x128xbf16, #tpu.memory_space<vmem>>, vector<16x128xbf16>,
    return
  }
  func.func @transform_0(%arg0: i32, %arg1: i32) -> (i32, i32) {
    %c0_i32 = arith.constant 0 : i32
    %c0_i32_0 = arith.constant 0 : i32
    return %arg0, %c0_i32 : i32, i32
  }
  func.func @transform_1(%arg0: i32, %arg1: i32) -> (i32, i32) {
    %c0_i32 = arith.constant 0 : i32
    %c0_i32_0 = arith.constant 0 : i32
    return %c0_i32, %arg1 : i32, i32
  }
  func.func @transform_2(%arg0: i32, %arg1: i32) -> (i32, i32) {
    %c0_i32 = arith.constant 0 : i32
    %c0_i32_0 = arith.constant 0 : i32
    return %c0_i32, %arg1 : i32, i32
  }
  func.func @transform_3(%arg0: i32, %arg1: i32) -> (i32, i32) {
    %c0_i32 = arith.constant 0 : i32
    return %arg0, %arg1 : i32, i32
  }
}

module attributes {stable_mosaic.version = 11 : i64} {
  func.func @_matmul_bias_act_kernel_single_k(%arg0: i32, %arg1: i32, %arg2: memref<16x64xbf16, #tpu.memory_space<vmem>>, %arg3: memref<64x256xbf16, #tpu.memory_space<vmem>>, %arg4: memref<1x256xf32, #tpu.memory_space<vmem>>, %arg5: memref<16x256xbf16, #tpu.memory_space<vmem>>) attributes {dimension_semantics = [#tpu.dimension_semantics<parallel>, #tpu.dimension_semantics<parallel>], iteration_bounds = array<i64: 1, 2>, scalar_prefetch = 0 : i64, scratch_operands = 0 : i64, tpu.core_type = #tpu.core_type<tc>, window_params = [{transform_indices = @transform_0, window_bounds = array<i64: 16, 64>}, {transform_indices = @transform_1, window_bounds = array<i64: 64, 256>}, {transform_indices = @transform_2, window_bounds = array<i64: 1, 256>}, {transform_indices = @transform_3, window_bounds = array<i64: 16, 256>}]} {
    %c0 = arith.constant 0 : index
    %c0_0 = arith.constant 0 : index
    %0 = vector.load %arg2[%c0, %c0_0] : memref<16x64xbf16, #tpu.memory_space<vmem>>, vector<16x64xbf16>
    %c0_1 = arith.constant 0 : index
    %c0_2 = arith.constant 0 : index
    %1 = vector.load %arg3[%c0_1, %c0_2] : memref<64x256xbf16, #tpu.memory_space<vmem>>, vector<64x256xbf16>
    %cst = arith.constant dense<0.000000e+00> : vector<16x256xf32>
    %2 = tpu.matmul %0, %1, %cst {dimension_numbers = #tpu.dot_dimension_numbers<[1], [0], [0], [1], [0, 0, 1, 1], [], []>} : vector<16x64xbf16>, vector<64x256xbf16>, vector<16x256xf32> -> vector<16x256xf32>
    %c0_3 = arith.constant 0 : index
    %c0_4 = arith.constant 0 : index
    %3 = vector.load %arg4[%c0_3, %c0_4] : memref<1x256xf32, #tpu.memory_space<vmem>>, vector<1x256xf32>
    %4 = vector.broadcast %3 : vector<1x256xf32> to vector<16x256xf32>
    %5 = arith.addf %2, %4 : vector<16x256xf32>
    %cst_5 = arith.constant 0.000000e+00 : f32
    %6 = vector.broadcast %cst_5 : f32 to vector<16x256xf32>
    %7 = arith.maximumf %5, %6 : vector<16x256xf32>
    %8 = arith.truncf %7 : vector<16x256xf32> to vector<16x256xbf16>
    %c0_6 = arith.constant 0 : index
    %c0_7 = arith.constant 0 : index
    %9 = vector.load %arg5[%c0_6, %c0_7] : memref<16x256xbf16, #tpu.memory_space<vmem>>, vector<16x256xbf16>
    tpu.vector_store %arg5[%c0_6, %c0_7], %8 {strides = array<i32>} : memref<16x256xbf16, #tpu.memory_space<vmem>>, vector<16x256xbf16>,
    return
  }
  func.func @transform_0(%arg0: i32, %arg1: i32) -> (i32, i32) {
    %c0_i32 = arith.constant 0 : i32
    %c0_i32_0 = arith.constant 0 : i32
    return %arg0, %c0_i32 : i32, i32
  }
  func.func @transform_1(%arg0: i32, %arg1: i32) -> (i32, i32) {
    %c0_i32 = arith.constant 0 : i32
    %c0_i32_0 = arith.constant 0 : i32
    return %c0_i32, %arg1 : i32, i32
  }
  func.func @transform_2(%arg0: i32, %arg1: i32) -> (i32, i32) {
    %c0_i32 = arith.constant 0 : i32
    %c0_i32_0 = arith.constant 0 : i32
    return %c0_i32, %arg1 : i32, i32
  }
  func.func @transform_3(%arg0: i32, %arg1: i32) -> (i32, i32) {
    %c0_i32 = arith.constant 0 : i32
    return %arg0, %arg1 : i32, i32
  }
}

module attributes {stable_mosaic.version = 11 : i64} {
  func.func @_matmul_bias_act_kernel_single_k(%arg0: i32, %arg1: i32, %arg2: memref<16x512xbf16, #tpu.memory_space<vmem>>, %arg3: memref<512x128xbf16, #tpu.memory_space<vmem>>, %arg4: memref<1x128xf32, #tpu.memory_space<vmem>>, %arg5: memref<16x128xf32, #tpu.memory_space<vmem>>) attributes {dimension_semantics = [#tpu.dimension_semantics<parallel>, #tpu.dimension_semantics<parallel>], iteration_bounds = array<i64: 1, 1>, scalar_prefetch = 0 : i64, scratch_operands = 0 : i64, tpu.core_type = #tpu.core_type<tc>, window_params = [{transform_indices = @transform_0, window_bounds = array<i64: 16, 512>}, {transform_indices = @transform_1, window_bounds = array<i64: 512, 128>}, {transform_indices = @transform_2, window_bounds = array<i64: 1, 128>}, {transform_indices = @transform_3, window_bounds = array<i64: 16, 128>}]} {
    %c0 = arith.constant 0 : index
    %c0_0 = arith.constant 0 : index
    %0 = vector.load %arg2[%c0, %c0_0] : memref<16x512xbf16, #tpu.memory_space<vmem>>, vector<16x512xbf16>
    %c0_1 = arith.constant 0 : index
    %c0_2 = arith.constant 0 : index
    %1 = vector.load %arg3[%c0_1, %c0_2] : memref<512x128xbf16, #tpu.memory_space<vmem>>, vector<512x128xbf16>
    %cst = arith.constant dense<0.000000e+00> : vector<16x128xf32>
    %2 = tpu.matmul %0, %1, %cst {dimension_numbers = #tpu.dot_dimension_numbers<[1], [0], [0], [1], [0, 0, 1, 1], [], []>} : vector<16x512xbf16>, vector<512x128xbf16>, vector<16x128xf32> -> vector<16x128xf32>
    %c0_3 = arith.constant 0 : index
    %c0_4 = arith.constant 0 : index
    %3 = vector.load %arg4[%c0_3, %c0_4] : memref<1x128xf32, #tpu.memory_space<vmem>>, vector<1x128xf32>
    %4 = vector.broadcast %3 : vector<1x128xf32> to vector<16x128xf32>
    %5 = arith.addf %2, %4 : vector<16x128xf32>
    %c0_5 = arith.constant 0 : index
    %c0_6 = arith.constant 0 : index
    %6 = vector.load %arg5[%c0_5, %c0_6] : memref<16x128xf32, #tpu.memory_space<vmem>>, vector<16x128xf32>
    tpu.vector_store %arg5[%c0_5, %c0_6], %5 {strides = array<i32>} : memref<16x128xf32, #tpu.memory_space<vmem>>, vector<16x128xf32>,
    return
  }
  func.func @transform_0(%arg0: i32, %arg1: i32) -> (i32, i32) {
    %c0_i32 = arith.constant 0 : i32
    %c0_i32_0 = arith.constant 0 : i32
    return %arg0, %c0_i32 : i32, i32
  }
  func.func @transform_1(%arg0: i32, %arg1: i32) -> (i32, i32) {
    %c0_i32 = arith.constant 0 : i32
    %c0_i32_0 = arith.constant 0 : i32
    return %c0_i32, %arg1 : i32, i32
  }
  func.func @transform_2(%arg0: i32, %arg1: i32) -> (i32, i32) {
    %c0_i32 = arith.constant 0 : i32
    %c0_i32_0 = arith.constant 0 : i32
    return %c0_i32, %arg1 : i32, i32
  }
  func.func @transform_3(%arg0: i32, %arg1: i32) -> (i32, i32) {
    %c0_i32 = arith.constant 0 : i32
    return %arg0, %arg1 : i32, i32
  }
}

</mosaic_0001>

<llo_original>
// kernel: dqn_forward_pallas.5
$region0: #{dqn_forward_pallas.5}
  #allocation0 [shape = 'u32[]', space=smem, size = 0x4, offset = 0x4, fixed_abs, tag = 'smem constant byte address 0x4 - core index']
  #allocation1 [shape = 'u32[144,128]{1,0:T(1,128)}', space=vmem, size = 0x12000, scoped, tag = 'internal scratch']
  %s0 = inlined_call_operand.vmem [shape: bf16[128,256], index: 0, kind: input, shape index: {}]
  %s1 = inlined_call_operand.vmem [shape: bf16[256,128], index: 1, kind: input, shape index: {}]
  %s2 = inlined_call_operand.vmem [shape: f32[1,128], index: 2, kind: input, shape index: {}]
  %s3 = inlined_call_operand.vmem [shape: bf16[128,128], index: 3, kind: output, shape index: {}]
  %s4 = sld [smem:[#allocation0]]
  $region22: #{dqn_forward_pallas.5} parent=0
    _
  %s6 = ssub.s32 1, %s4
  %s7 = scalar_select 0, %s6, %s4
  // Predicated region
  $region2: #{dqn_forward_pallas.5} parent=0 // pred_check
    _
  $region3: #{dqn_forward_pallas.5} parent=0 // pred_check_branch
    %9 = sbr.rel (0) target = $region5
  $region4: #{dqn_forward_pallas.5} parent=0 // pred_region
    _
  $region5: #{dqn_forward_pallas.5} parent=0 // pred_fallthru
    _
  // Predicated region
  $region6: #{dqn_forward_pallas.5} parent=0 // pred_check
    _
  $region7: #{dqn_forward_pallas.5} parent=0 // pred_check_branch
    %11 = sbr.rel (0) target = $region9
  $region8: #{dqn_forward_pallas.5} parent=0 // pred_region
    _
  $region9: #{dqn_forward_pallas.5} parent=0 // pred_fallthru
    _
  // Predicated region
  $region10: #{dqn_forward_pallas.5} parent=0 // pred_check
    _
  $region11: #{dqn_forward_pallas.5} parent=0 // pred_check_branch
    %13 = sbr.rel (0) target = $region13
  $region12: #{dqn_forward_pallas.5} parent=0 // pred_region
    _
  $region13: #{dqn_forward_pallas.5} parent=0 // pred_fallthru
    _
  %v15 = vld [vmem:[%s0] sm:$0xff]
  %v16 = vld [vmem:[%s0 + $0x8] sm:$0xff]
  %v17 = vld [vmem:[%s0 + $0x10] sm:$0xff]
  %v18 = vld [vmem:[%s0 + $0x18] sm:$0xff]
  %v19 = vld [vmem:[%s0 + $0x20] sm:$0xff]
  %v20 = vld [vmem:[%s0 + $0x28] sm:$0xff]
  %v21 = vld [vmem:[%s0 + $0x30] sm:$0xff]
  %v22 = vld [vmem:[%s0 + $0x38] sm:$0xff]
  %v23 = vld [vmem:[%s0 + $0x40] sm:$0xff]
  %v24 = vld [vmem:[%s0 + $0x48] sm:$0xff]
  %v25 = vld [vmem:[%s0 + $0x50] sm:$0xff]
  %v26 = vld [vmem:[%s0 + $0x58] sm:$0xff]
  %v27 = vld [vmem:[%s0 + $0x60] sm:$0xff]
  %v28 = vld [vmem:[%s0 + $0x68] sm:$0xff]
  %v29 = vld [vmem:[%s0 + $0x70] sm:$0xff]
  %v30 = vld [vmem:[%s0 + $0x78] sm:$0xff]
  %v31 = vld [vmem:[%s1] sm:$0xf]
  %v32 = vld [vmem:[%s1 + $0x4] sm:$0xf]
  %v33 = vld [vmem:[%s1 + $0x8] sm:$0xf]
  %v34 = vld [vmem:[%s1 + $0xc] sm:$0xf]
  %v35 = vld [vmem:[%s1 + $0x10] sm:$0xf]
  %v36 = vld [vmem:[%s1 + $0x14] sm:$0xf]
  %v37 = vld [vmem:[%s1 + $0x18] sm:$0xf]
  %v38 = vld [vmem:[%s1 + $0x1c] sm:$0xf]
  %v39 = vld [vmem:[%s1 + $0x20] sm:$0xf]
  %v40 = vld [vmem:[%s1 + $0x24] sm:$0xf]
  %v41 = vld [vmem:[%s1 + $0x28] sm:$0xf]
  %v42 = vld [vmem:[%s1 + $0x2c] sm:$0xf]
  %v43 = vld [vmem:[%s1 + $0x30] sm:$0xf]
  %v44 = vld [vmem:[%s1 + $0x34] sm:$0xf]
  %v45 = vld [vmem:[%s1 + $0x38] sm:$0xf]
  %v46 = vld [vmem:[%s1 + $0x3c] sm:$0xf]
  %v47 = vld [vmem:[%s1 + $0x40] sm:$0xf]
  %v48 = vld [vmem:[%s1 + $0x44] sm:$0xf]
  %v49 = vld [vmem:[%s1 + $0x48] sm:$0xf]
  %v50 = vld [vmem:[%s1 + $0x4c] sm:$0xf]
  %v51 = vld [vmem:[%s1 + $0x50] sm:$0xf]
  %v52 = vld [vmem:[%s1 + $0x54] sm:$0xf]
  %v53 = vld [vmem:[%s1 + $0x58] sm:$0xf]
  %v54 = vld [vmem:[%s1 + $0x5c] sm:$0xf]
  %v55 = vld [vmem:[%s1 + $0x60] sm:$0xf]
  %v56 = vld [vmem:[%s1 + $0x64] sm:$0xf]
  %v57 = vld [vmem:[%s1 + $0x68] sm:$0xf]
  %v58 = vld [vmem:[%s1 + $0x6c] sm:$0xf]
  %v59 = vld [vmem:[%s1 + $0x70] sm:$0xf]
  %v60 = vld [vmem:[%s1 + $0x74] sm:$0xf]
  %v61 = vld [vmem:[%s1 + $0x78] sm:$0xf]
  %v62 = vld [vmem:[%s1 + $0x7c] sm:$0xf]
  %v63 = vld [vmem:[%s2] sm:$0x1]
  %v65 = vlaneseq
  %v66 = vshrl.u32 %v65, 7
  %v67 = vsub.s32 0, %v66
  %v68 = vrot.slane %v63, %v67
  %v86 = vunpack.c.l.b16 %v15
  %v87 = vunpack.c.h.b16 %v15
  %v88 = vunpack.c.l.b16 %v16
  %v89 = vunpack.c.h.b16 %v16
  %v90 = vunpack.c.l.b16 %v17
  %v91 = vunpack.c.h.b16 %v17
  %v92 = vunpack.c.l.b16 %v18
  %v93 = vunpack.c.h.b16 %v18
  %v94 = vunpack.c.l.b16 %v19
  %v95 = vunpack.c.h.b16 %v19
  %v96 = vunpack.c.l.b16 %v20
  %v97 = vunpack.c.h.b16 %v20
  %v98 = vunpack.c.l.b16 %v21
  %v99 = vunpack.c.h.b16 %v21
  %v100 = vunpack.c.l.b16 %v22
  %v101 = vunpack.c.h.b16 %v22
  %v102 = vunpack.c.l.b16 %v23
  %v103 = vunpack.c.h.b16 %v23
  %v104 = vunpack.c.l.b16 %v24
  %v105 = vunpack.c.h.b16 %v24
  %v106 = vunpack.c.l.b16 %v25
  %v107 = vunpack.c.h.b16 %v25
  %v108 = vunpack.c.l.b16 %v26
  %v109 = vunpack.c.h.b16 %v26
  %v110 = vunpack.c.l.b16 %v27
  %v111 = vunpack.c.h.b16 %v27
  %v112 = vunpack.c.l.b16 %v28
  %v113 = vunpack.c.h.b16 %v28
  %v114 = vunpack.c.l.b16 %v29
  %v115 = vunpack.c.h.b16 %v29
  %v116 = vunpack.c.l.b16 %v30
  %v117 = vunpack.c.h.b16 %v30
  %v118 = vpack.c.b16 %v88, %v86
  %v119 = vpack.c.b16 %v89, %v87
  %v120 = vpack.c.b16 %v92, %v90
  %v121 = vpack.c.b16 %v93, %v91
  %v122 = vpack.c.b16 %v96, %v94
  %v123 = vpack.c.b16 %v97, %v95
  %v124 = vpack.c.b16 %v100, %v98
  %v125 = vpack.c.b16 %v101, %v99
  %v126 = vpack.c.b16 %v104, %v102
  %v127 = vpack.c.b16 %v105, %v103
  %v128 = vpack.c.b16 %v108, %v106
  %v129 = vpack.c.b16 %v109, %v107
  %v130 = vpack.c.b16 %v112, %v110
  %v131 = vpack.c.b16 %v113, %v111
  %v132 = vpack.c.b16 %v116, %v114
  %v133 = vpack.c.b16 %v117, %v115
  %v182 = vunpack.c.l.b16 %v31
  %v183 = vunpack.c.l.b16 %v32
  %v184 = vunpack.c.l.b16 %v33
  %v185 = vunpack.c.l.b16 %v34
  %v186 = vunpack.c.l.b16 %v35
  %v187 = vunpack.c.l.b16 %v36
  %v188 = vunpack.c.l.b16 %v37
  %v189 = vunpack.c.l.b16 %v38
  %v190 = vunpack.c.l.b16 %v39
  %v191 = vunpack.c.l.b16 %v40
  %v192 = vunpack.c.l.b16 %v41
  %v193 = vunpack.c.l.b16 %v42
  %v194 = vunpack.c.l.b16 %v43
  %v195 = vunpack.c.l.b16 %v44
  %v196 = vunpack.c.l.b16 %v45
  %v197 = vunpack.c.l.b16 %v46
  %v198 = vunpack.c.l.b16 %v47
  %v199 = vunpack.c.l.b16 %v48
  %v200 = vunpack.c.l.b16 %v49
  %v201 = vunpack.c.l.b16 %v50
  %v202 = vunpack.c.l.b16 %v51
  %v203 = vunpack.c.l.b16 %v52
  %v204 = vunpack.c.l.b16 %v53
  %v205 = vunpack.c.l.b16 %v54
  %v206 = vunpack.c.l.b16 %v55
  %v207 = vunpack.c.l.b16 %v56
  %v208 = vunpack.c.l.b16 %v57
  %v209 = vunpack.c.l.b16 %v58
  %v210 = vunpack.c.l.b16 %v59
  %v211 = vunpack.c.l.b16 %v60
  %v212 = vunpack.c.l.b16 %v61
  %v213 = vunpack.c.l.b16 %v62
  %v214 = vpack.c.b16 %v183, %v182
  %v215 = vpack.c.b16 %v185, %v184
  %v216 = vpack.c.b16 %v187, %v186
  %v217 = vpack.c.b16 %v189, %v188
  %v218 = vpack.c.b16 %v191, %v190
  %v219 = vpack.c.b16 %v193, %v192
  %v220 = vpack.c.b16 %v195, %v194
  %v221 = vpack.c.b16 %v197, %v196
  %v222 = vpack.c.b16 %v199, %v198
  %v223 = vpack.c.b16 %v201, %v200
  %v224 = vpack.c.b16 %v203, %v202
  %v225 = vpack.c.b16 %v205, %v204
  %v226 = vpack.c.b16 %v207, %v206
  %v227 = vpack.c.b16 %v209, %v208
  %v228 = vpack.c.b16 %v211, %v210
  %v229 = vpack.c.b16 %v213, %v212
  %246 = vmatprep.subr.bf16.mxu0 0
  %247 = vmatpush1.bf16.msra.mxu0 %v214
  %248 = vmatprep.subr.bf16.mxu0 0
  %249 = vmatpush1.bf16.msra.mxu0 %v215
  %250 = vmatprep.subr.bf16.mxu0 0
  %251 = vmatpush1.bf16.msra.mxu0 %v216
  %252 = vmatprep.subr.bf16.mxu0 0
  %253 = vmatpush1.bf16.msra.mxu0 %v217
  %254 = vmatprep.subr.bf16.mxu0 0
  %255 = vmatpush1.bf16.msra.mxu0 %v218
  %256 = vmatprep.subr.bf16.mxu0 0
  %257 = vmatpush1.bf16.msra.mxu0 %v219
  %258 = vmatprep.subr.bf16.mxu0 0
  %259 = vmatpush1.bf16.msra.mxu0 %v220
  %260 = vmatprep.subr.bf16.mxu0 0
  %261 = vmatpush1.bf16.msra.mxu0 %v221
  %262 = vmatprep.subr.bf16.mxu0 0
  %263 = vmatpush1.bf16.msra.mxu0 %v222
  %264 = vmatprep.subr.bf16.mxu0 0
  %265 = vmatpush1.bf16.msra.mxu0 %v223
  %266 = vmatprep.subr.bf16.mxu0 0
  %267 = vmatpush1.bf16.msra.mxu0 %v224
  %268 = vmatprep.subr.bf16.mxu0 0
  %269 = vmatpush1.bf16.msra.mxu0 %v225
  %270 = vmatprep.subr.bf16.mxu0 0
  %271 = vmatpush1.bf16.msra.mxu0 %v226
  %272 = vmatprep.subr.bf16.mxu0 0
  %273 = vmatpush1.bf16.msra.mxu0 %v227
  %274 = vmatprep.subr.bf16.mxu0 0
  %275 = vmatpush1.bf16.msra.mxu0 %v228
  %276 = vmatprep.subr.bf16.mxu0 0
  %277 = vmatpush1.bf16.msra.mxu0 %v229
  %278 = vmatprep.mubr.bf16.mxu0 %v119
  %279 = vmatmul.mubr.bf16.gmra.mrb[0].mxu0 %v118
  %v280 = vpop.f32.mrb[0].mxu0
  %v281 = vadd.f32 %v68, %v280
  %v282 = vpop.f32.mrb[0].mxu0
  %v283 = vpop.f32.mrb[0].mxu0
  %v284 = vadd.f32 %v68, %v283
  %v285 = vpop.f32.mrb[0].mxu0
  %286 = vmatprep.mubr.bf16.mxu0 %v121
  %287 = vmatmul.mubr.bf16.gmra.mrb[0].mxu0 %v120
  %v288 = vpop.f32.mrb[0].mxu0
  %v289 = vadd.f32 %v68, %v288
  %v290 = vpop.f32.mrb[0].mxu0
  %v291 = vpop.f32.mrb[0].mxu0
  %v292 = vadd.f32 %v68, %v291
  %v293 = vpop.f32.mrb[0].mxu0
  %294 = vmatprep.mubr.bf16.mxu0 %v123
  %295 = vmatmul.mubr.bf16.gmra.mrb[0].mxu0 %v122
  %v296 = vpop.f32.mrb[0].mxu0
  %v297 = vadd.f32 %v68, %v296
  %v298 = vpop.f32.mrb[0].mxu0
  %v299 = vpop.f32.mrb[0].mxu0
  %v300 = vadd.f32 %v68, %v299
  %v301 = vpop.f32.mrb[0].mxu0
  %302 = vmatprep.mubr.bf16.mxu0 %v125
  %303 = vmatmul.mubr.bf16.gmra.mrb[0].mxu0 %v124
  %v304 = vpop.f32.mrb[0].mxu0
  %v305 = vadd.f32 %v68, %v304
  %v306 = vpop.f32.mrb[0].mxu0
  %v307 = vpop.f32.mrb[0].mxu0
  %v308 = vadd.f32 %v68, %v307
  %v309 = vpop.f32.mrb[0].mxu0
  %310 = vmatprep.mubr.bf16.mxu0 %v127
  %311 = vmatmul.mubr.bf16.gmra.mrb[0].mxu0 %v126
  %v312 = vpop.f32.mrb[0].mxu0
  %v313 = vadd.f32 %v68, %v312
  %v314 = vpop.f32.mrb[0].mxu0
  %v315 = vpop.f32.mrb[0].mxu0
  %v316 = vadd.f32 %v68, %v315
  %v317 = vpop.f32.mrb[0].mxu0
  %318 = vmatprep.mubr.bf16.mxu0 %v129
  %319 = vmatmul.mubr.bf16.gmra.mrb[0].mxu0 %v128
  %v320 = vpop.f32.mrb[0].mxu0
  %v321 = vadd.f32 %v68, %v320
  %v322 = vpop.f32.mrb[0].mxu0
  %v323 = vpop.f32.mrb[0].mxu0
  %v324 = vadd.f32 %v68, %v323
  %v325 = vpop.f32.mrb[0].mxu0
  %326 = vmatprep.mubr.bf16.mxu0 %v131
  %327 = vmatmul.mubr.bf16.gmra.mrb[0].mxu0 %v130
  %v328 = vpop.f32.mrb[0].mxu0
  %v329 = vadd.f32 %v68, %v328
  %v330 = vpop.f32.mrb[0].mxu0
  %v331 = vpop.f32.mrb[0].mxu0
  %v332 = vadd.f32 %v68, %v331
  %v333 = vpop.f32.mrb[0].mxu0
  %334 = vmatprep.mubr.bf16.mxu0 %v133
  %335 = vmatmul.mubr.bf16.gmra.mrb[0].mxu0 %v132
  %v336 = vpop.f32.mrb[0].mxu0
  %v337 = vadd.f32 %v68, %v336
  %v338 = vpop.f32.mrb[0].mxu0
  %v339 = vpop.f32.mrb[0].mxu0
  %v340 = vadd.f32 %v68, %v339
  %v341 = vpop.f32.mrb[0].mxu0
  %342 = vdwg.mxu0
  %v343 = vmax.f32 %v281, 0.0
  %v344 = vmax.f32 %v284, 0.0
  %v345 = vmax.f32 %v289, 0.0
  %v346 = vmax.f32 %v292, 0.0
  %v347 = vmax.f32 %v297, 0.0
  %v348 = vmax.f32 %v300, 0.0
  %v349 = vmax.f32 %v305, 0.0
  %v350 = vmax.f32 %v308, 0.0
  %v351 = vmax.f32 %v313, 0.0
  %v352 = vmax.f32 %v316, 0.0
  %v353 = vmax.f32 %v321, 0.0
  %v354 = vmax.f32 %v324, 0.0
  %v355 = vmax.f32 %v329, 0.0
  %v356 = vmax.f32 %v332, 0.0
  %v357 = vmax.f32 %v337, 0.0
  %v358 = vmax.f32 %v340, 0.0
  %v359 = vpack.c.bf16 %v344, %v343
  %v360 = vpack.c.bf16 %v346, %v345
  %v361 = vpack.c.bf16 %v348, %v347
  %v362 = vpack.c.bf16 %v350, %v349
  %v363 = vpack.c.bf16 %v352, %v351
  %v364 = vpack.c.bf16 %v354, %v353
  %v365 = vpack.c.bf16 %v356, %v355
  %v366 = vpack.c.bf16 %v358, %v357
  %v375 = vunpack.c.l.b16 %v359
  %v376 = vunpack.c.h.b16 %v359
  %v377 = vunpack.c.l.b16 %v360
  %v378 = vunpack.c.h.b16 %v360
  %v379 = vunpack.c.l.b16 %v361
  %v380 = vunpack.c.h.b16 %v361
  %v381 = vunpack.c.l.b16 %v362
  %v382 = vunpack.c.h.b16 %v362
  %v383 = vunpack.c.l.b16 %v363
  %v384 = vunpack.c.h.b16 %v363
  %v385 = vunpack.c.l.b16 %v364
  %v386 = vunpack.c.h.b16 %v364
  %v387 = vunpack.c.l.b16 %v365
  %v388 = vunpack.c.h.b16 %v365
  %v389 = vunpack.c.l.b16 %v366
  %v390 = vunpack.c.h.b16 %v366
  %v391 = vpack.c.b16 %v375, %v375
  %v392 = vpack.c.b16 %v376, %v376
  %v393 = vpack.c.b16 %v377, %v377
  %v394 = vpack.c.b16 %v378, %v378
  %v395 = vpack.c.b16 %v379, %v379
  %v396 = vpack.c.b16 %v380, %v380
  %v397 = vpack.c.b16 %v381, %v381
  %v398 = vpack.c.b16 %v382, %v382
  %v399 = vpack.c.b16 %v383, %v383
  %v400 = vpack.c.b16 %v384, %v384
  %v401 = vpack.c.b16 %v385, %v385
  %v402 = vpack.c.b16 %v386, %v386
  %v403 = vpack.c.b16 %v387, %v387
  %v404 = vpack.c.b16 %v388, %v388
  %v405 = vpack.c.b16 %v389, %v389
  %v406 = vpack.c.b16 %v390, %v390
  %423 = vst [vmem:[%s3] sm:$0xf] %v391
  %424 = vst [vmem:[%s3 + $0x4] sm:$0xf] %v392
  %425 = vst [vmem:[%s3 + $0x8] sm:$0xf] %v393
  %426 = vst [vmem:[%s3 + $0xc] sm:$0xf] %v394
  %427 = vst [vmem:[%s3 + $0x10] sm:$0xf] %v395
  %428 = vst [vmem:[%s3 + $0x14] sm:$0xf] %v396
  %429 = vst [vmem:[%s3 + $0x18] sm:$0xf] %v397
  %430 = vst [vmem:[%s3 + $0x1c] sm:$0xf] %v398
  %431 = vst [vmem:[%s3 + $0x20] sm:$0xf] %v399
  %432 = vst [vmem:[%s3 + $0x24] sm:$0xf] %v400
  %433 = vst [vmem:[%s3 + $0x28] sm:$0xf] %v401
  %434 = vst [vmem:[%s3 + $0x2c] sm:$0xf] %v402
  %435 = vst [vmem:[%s3 + $0x30] sm:$0xf] %v403
  %436 = vst [vmem:[%s3 + $0x34] sm:$0xf] %v404
  %437 = vst [vmem:[%s3 + $0x38] sm:$0xf] %v405
  %438 = vst [vmem:[%s3 + $0x3c] sm:$0xf] %v406
  // Predicated region
  $region14: #{dqn_forward_pallas.5} parent=0 // pred_check
    _
  $region15: #{dqn_forward_pallas.5} parent=0 // pred_check_branch
    %440 = sbr.rel (0) target = $region17
  $region16: #{dqn_forward_pallas.5} parent=0 // pred_region
    _
  $region17: #{dqn_forward_pallas.5} parent=0 // pred_fallthru
    _
  // Predicated region
  $region18: #{dqn_forward_pallas.5} parent=0 // pred_check
    _
  $region19: #{dqn_forward_pallas.5} parent=0 // pred_check_branch
    %442 = sbr.rel (0) target = $region21
  $region20: #{dqn_forward_pallas.5} parent=0 // pred_region
    _
  $region21: #{dqn_forward_pallas.5} parent=0 // pred_fallthru
    _

// kernel: dqn_forward_pallas.6
$region0: #{dqn_forward_pallas.6}
  #allocation0 [shape = 'u32[]', space=smem, size = 0x4, offset = 0x4, fixed_abs, tag = 'smem constant byte address 0x4 - core index']
  #allocation1 [shape = 'u32[144,128]{1,0:T(1,128)}', space=vmem, size = 0x12000, scoped, tag = 'internal scratch']
  %s0 = inlined_call_operand.vmem [shape: bf16[32,512], index: 0, kind: input, shape index: {}]
  %s1 = inlined_call_operand.vmem [shape: bf16[512,128], index: 1, kind: input, shape index: {}]
  %s2 = inlined_call_operand.vmem [shape: f32[1,128], index: 2, kind: input, shape index: {}]
  %s3 = inlined_call_operand.vmem [shape: bf16[32,128], index: 3, kind: output, shape index: {}]
  %s4 = sld [smem:[#allocation0]]
  $region22: #{dqn_forward_pallas.6} parent=0
    _
  %s6 = ssub.s32 1, %s4
  %s7 = scalar_select 0, %s6, %s4
  // Predicated region
  $region2: #{dqn_forward_pallas.6} parent=0 // pred_check
    _
  $region3: #{dqn_forward_pallas.6} parent=0 // pred_check_branch
    %9 = sbr.rel (0) target = $region5
  $region4: #{dqn_forward_pallas.6} parent=0 // pred_region
    _
  $region5: #{dqn_forward_pallas.6} parent=0 // pred_fallthru
    _
  // Predicated region
  $region6: #{dqn_forward_pallas.6} parent=0 // pred_check
    _
  $region7: #{dqn_forward_pallas.6} parent=0 // pred_check_branch
    %11 = sbr.rel (0) target = $region9
  $region8: #{dqn_forward_pallas.6} parent=0 // pred_region
    _
  $region9: #{dqn_forward_pallas.6} parent=0 // pred_fallthru
    _
  // Predicated region
  $region10: #{dqn_forward_pallas.6} parent=0 // pred_check
    _
  $region11: #{dqn_forward_pallas.6} parent=0 // pred_check_branch
    %13 = sbr.rel (0) target = $region13
  $region12: #{dqn_forward_pallas.6} parent=0 // pred_region
    _
  $region13: #{dqn_forward_pallas.6} parent=0 // pred_fallthru
    _
  %v15 = vld [vmem:[%s0] sm:$0xff]
  %v16 = vld [vmem:[%s0 + $0x8] sm:$0xff]
  %v17 = vld [vmem:[%s0 + $0x10] sm:$0xff]
  %v18 = vld [vmem:[%s0 + $0x18] sm:$0xff]
  %v19 = vld [vmem:[%s0 + $0x20] sm:$0xff]
  %v20 = vld [vmem:[%s0 + $0x28] sm:$0xff]
  %v21 = vld [vmem:[%s0 + $0x30] sm:$0xff]
  %v22 = vld [vmem:[%s0 + $0x38] sm:$0xff]
  %v23 = vld [vmem:[%s1] sm:$0xf]
  %v24 = vld [vmem:[%s1 + $0x4] sm:$0xf]
  %v25 = vld [vmem:[%s1 + $0x8] sm:$0xf]
  %v26 = vld [vmem:[%s1 + $0xc] sm:$0xf]
  %v27 = vld [vmem:[%s1 + $0x10] sm:$0xf]
  %v28 = vld [vmem:[%s1 + $0x14] sm:$0xf]
  %v29 = vld [vmem:[%s1 + $0x18] sm:$0xf]
  %v30 = vld [vmem:[%s1 + $0x1c] sm:$0xf]
  %v31 = vld [vmem:[%s1 + $0x20] sm:$0xf]
  %v32 = vld [vmem:[%s1 + $0x24] sm:$0xf]
  %v33 = vld [vmem:[%s1 + $0x28] sm:$0xf]
  %v34 = vld [vmem:[%s1 + $0x2c] sm:$0xf]
  %v35 = vld [vmem:[%s1 + $0x30] sm:$0xf]
  %v36 = vld [vmem:[%s1 + $0x34] sm:$0xf]
  %v37 = vld [vmem:[%s1 + $0x38] sm:$0xf]
  %v38 = vld [vmem:[%s1 + $0x3c] sm:$0xf]
  %v39 = vld [vmem:[%s1 + $0x40] sm:$0xf]
  %v40 = vld [vmem:[%s1 + $0x44] sm:$0xf]
  %v41 = vld [vmem:[%s1 + $0x48] sm:$0xf]
  %v42 = vld [vmem:[%s1 + $0x4c] sm:$0xf]
  %v43 = vld [vmem:[%s1 + $0x50] sm:$0xf]
  %v44 = vld [vmem:[%s1 + $0x54] sm:$0xf]
  %v45 = vld [vmem:[%s1 + $0x58] sm:$0xf]
  %v46 = vld [vmem:[%s1 + $0x5c] sm:$0xf]
  %v47 = vld [vmem:[%s1 + $0x60] sm:$0xf]
  %v48 = vld [vmem:[%s1 + $0x64] sm:$0xf]
  %v49 = vld [vmem:[%s1 + $0x68] sm:$0xf]
  %v50 = vld [vmem:[%s1 + $0x6c] sm:$0xf]
  %v51 = vld [vmem:[%s1 + $0x70] sm:$0xf]
  %v52 = vld [vmem:[%s1 + $0x74] sm:$0xf]
  %v53 = vld [vmem:[%s1 + $0x78] sm:$0xf]
  %v54 = vld [vmem:[%s1 + $0x7c] sm:$0xf]
  %v55 = vld [vmem:[%s1 + $0x80] sm:$0xf]
  %v56 = vld [vmem:[%s1 + $0x84] sm:$0xf]
  %v57 = vld [vmem:[%s1 + $0x88] sm:$0xf]
  %v58 = vld [vmem:[%s1 + $0x8c] sm:$0xf]
  %v59 = vld [vmem:[%s1 + $0x90] sm:$0xf]
  %v60 = vld [vmem:[%s1 + $0x94] sm:$0xf]
  %v61 = vld [vmem:[%s1 + $0x98] sm:$0xf]
  %v62 = vld [vmem:[%s1 + $0x9c] sm:$0xf]
  %v63 = vld [vmem:[%s1 + $0xa0] sm:$0xf]
  %v64 = vld [vmem:[%s1 + $0xa4] sm:$0xf]
  %v65 = vld [vmem:[%s1 + $0xa8] sm:$0xf]
  %v66 = vld [vmem:[%s1 + $0xac] sm:$0xf]
  %v67 = vld [vmem:[%s1 + $0xb0] sm:$0xf]
  %v68 = vld [vmem:[%s1 + $0xb4] sm:$0xf]
  %v69 = vld [vmem:[%s1 + $0xb8] sm:$0xf]
  %v70 = vld [vmem:[%s1 + $0xbc] sm:$0xf]
  %v71 = vld [vmem:[%s1 + $0xc0] sm:$0xf]
  %v72 = vld [vmem:[%s1 + $0xc4] sm:$0xf]
  %v73 = vld [vmem:[%s1 + $0xc8] sm:$0xf]
  %v74 = vld [vmem:[%s1 + $0xcc] sm:$0xf]
  %v75 = vld [vmem:[%s1 + $0xd0] sm:$0xf]
  %v76 = vld [vmem:[%s1 + $0xd4] sm:$0xf]
  %v77 = vld [vmem:[%s1 + $0xd8] sm:$0xf]
  %v78 = vld [vmem:[%s1 + $0xdc] sm:$0xf]
  %v79 = vld [vmem:[%s1 + $0xe0] sm:$0xf]
  %v80 = vld [vmem:[%s1 + $0xe4] sm:$0xf]
  %v81 = vld [vmem:[%s1 + $0xe8] sm:$0xf]
  %v82 = vld [vmem:[%s1 + $0xec] sm:$0xf]
  %v83 = vld [vmem:[%s1 + $0xf0] sm:$0xf]
  %v84 = vld [vmem:[%s1 + $0xf4] sm:$0xf]
  %v85 = vld [vmem:[%s1 + $0xf8] sm:$0xf]
  %v86 = vld [vmem:[%s1 + $0xfc] sm:$0xf]
  %v87 = vld [vmem:[%s2] sm:$0x1]
  %v89 = vlaneseq
  %v90 = vshrl.u32 %v89, 7
  %v91 = vsub.s32 0, %v90
  %v92 = vrot.slane %v87, %v91
  %v102 = vunpack.c.l.b16 %v15
  %v103 = vunpack.c.h.b16 %v15
  %v104 = vunpack.c.l.b16 %v16
  %v105 = vunpack.c.h.b16 %v16
  %v106 = vunpack.c.l.b16 %v17
  %v107 = vunpack.c.h.b16 %v17
  %v108 = vunpack.c.l.b16 %v18
  %v109 = vunpack.c.h.b16 %v18
  %v110 = vunpack.c.l.b16 %v19
  %v111 = vunpack.c.h.b16 %v19
  %v112 = vunpack.c.l.b16 %v20
  %v113 = vunpack.c.h.b16 %v20
  %v114 = vunpack.c.l.b16 %v21
  %v115 = vunpack.c.h.b16 %v21
  %v116 = vunpack.c.l.b16 %v22
  %v117 = vunpack.c.h.b16 %v22
  %v118 = vpack.c.b16 %v106, %v102
  %v119 = vpack.c.b16 %v107, %v103
  %v120 = vpack.c.b16 %v108, %v104
  %v121 = vpack.c.b16 %v109, %v105
  %v122 = vpack.c.b16 %v114, %v110
  %v123 = vpack.c.b16 %v115, %v111
  %v124 = vpack.c.b16 %v116, %v112
  %v125 = vpack.c.b16 %v117, %v113
  %v198 = vunpack.c.l.b16 %v23
  %v199 = vunpack.c.l.b16 %v24
  %v200 = vunpack.c.l.b16 %v25
  %v201 = vunpack.c.l.b16 %v26
  %v202 = vunpack.c.l.b16 %v27
  %v203 = vunpack.c.l.b16 %v28
  %v204 = vunpack.c.l.b16 %v29
  %v205 = vunpack.c.l.b16 %v30
  %v206 = vunpack.c.l.b16 %v31
  %v207 = vunpack.c.l.b16 %v32
  %v208 = vunpack.c.l.b16 %v33
  %v209 = vunpack.c.l.b16 %v34
  %v210 = vunpack.c.l.b16 %v35
  %v211 = vunpack.c.l.b16 %v36
  %v212 = vunpack.c.l.b16 %v37
  %v213 = vunpack.c.l.b16 %v38
  %v214 = vunpack.c.l.b16 %v39
  %v215 = vunpack.c.l.b16 %v40
  %v216 = vunpack.c.l.b16 %v41
  %v217 = vunpack.c.l.b16 %v42
  %v218 = vunpack.c.l.b16 %v43
  %v219 = vunpack.c.l.b16 %v44
  %v220 = vunpack.c.l.b16 %v45
  %v221 = vunpack.c.l.b16 %v46
  %v222 = vunpack.c.l.b16 %v47
  %v223 = vunpack.c.l.b16 %v48
  %v224 = vunpack.c.l.b16 %v49
  %v225 = vunpack.c.l.b16 %v50
  %v226 = vunpack.c.l.b16 %v51
  %v227 = vunpack.c.l.b16 %v52
  %v228 = vunpack.c.l.b16 %v53
  %v229 = vunpack.c.l.b16 %v54
  %v230 = vunpack.c.l.b16 %v55
  %v231 = vunpack.c.l.b16 %v56
  %v232 = vunpack.c.l.b16 %v57
  %v233 = vunpack.c.l.b16 %v58
  %v234 = vunpack.c.l.b16 %v59
  %v235 = vunpack.c.l.b16 %v60
  %v236 = vunpack.c.l.b16 %v61
  %v237 = vunpack.c.l.b16 %v62
  %v238 = vunpack.c.l.b16 %v63
  %v239 = vunpack.c.l.b16 %v64
  %v240 = vunpack.c.l.b16 %v65
  %v241 = vunpack.c.l.b16 %v66
  %v242 = vunpack.c.l.b16 %v67
  %v243 = vunpack.c.l.b16 %v68
  %v244 = vunpack.c.l.b16 %v69
  %v245 = vunpack.c.l.b16 %v70
  %v246 = vunpack.c.l.b16 %v71
  %v247 = vunpack.c.l.b16 %v72
  %v248 = vunpack.c.l.b16 %v73
  %v249 = vunpack.c.l.b16 %v74
  %v250 = vunpack.c.l.b16 %v75
  %v251 = vunpack.c.l.b16 %v76
  %v252 = vunpack.c.l.b16 %v77
  %v253 = vunpack.c.l.b16 %v78
  %v254 = vunpack.c.l.b16 %v79
  %v255 = vunpack.c.l.b16 %v80
  %v256 = vunpack.c.l.b16 %v81
  %v257 = vunpack.c.l.b16 %v82
  %v258 = vunpack.c.l.b16 %v83
  %v259 = vunpack.c.l.b16 %v84
  %v260 = vunpack.c.l.b16 %v85
  %v261 = vunpack.c.l.b16 %v86
  %v262 = vpack.c.b16 %v199, %v198
  %v263 = vpack.c.b16 %v201, %v200
  %v264 = vpack.c.b16 %v203, %v202
  %v265 = vpack.c.b16 %v205, %v204
  %v266 = vpack.c.b16 %v207, %v206
  %v267 = vpack.c.b16 %v209, %v208
  %v268 = vpack.c.b16 %v211, %v210
  %v269 = vpack.c.b16 %v213, %v212
  %v270 = vpack.c.b16 %v215, %v214
  %v271 = vpack.c.b16 %v217, %v216
  %v272 = vpack.c.b16 %v219, %v218
  %v273 = vpack.c.b16 %v221, %v220
  %v274 = vpack.c.b16 %v223, %v222
  %v275 = vpack.c.b16 %v225, %v224
  %v276 = vpack.c.b16 %v227, %v226
  %v277 = vpack.c.b16 %v229, %v228
  %v278 = vpack.c.b16 %v231, %v230
  %v279 = vpack.c.b16 %v233, %v232
  %v280 = vpack.c.b16 %v235, %v234
  %v281 = vpack.c.b16 %v237, %v236
  %v282 = vpack.c.b16 %v239, %v238
  %v283 = vpack.c.b16 %v241, %v240
  %v284 = vpack.c.b16 %v243, %v242
  %v285 = vpack.c.b16 %v245, %v244
  %v286 = vpack.c.b16 %v247, %v246
  %v287 = vpack.c.b16 %v249, %v248
  %v288 = vpack.c.b16 %v251, %v250
  %v289 = vpack.c.b16 %v253, %v252
  %v290 = vpack.c.b16 %v255, %v254
  %v291 = vpack.c.b16 %v257, %v256
  %v292 = vpack.c.b16 %v259, %v258
  %v293 = vpack.c.b16 %v261, %v260
  %326 = vmatprep.subr.bf16.mxu0 0
  %327 = vmatpush1.bf16.msra.mxu0 %v262
  %328 = vmatprep.subr.bf16.mxu0 0
  %329 = vmatpush1.bf16.msra.mxu0 %v263
  %330 = vmatprep.subr.bf16.mxu0 0
  %331 = vmatpush1.bf16.msra.mxu0 %v264
  %332 = vmatprep.subr.bf16.mxu0 0
  %333 = vmatpush1.bf16.msra.mxu0 %v265
  %334 = vmatprep.subr.bf16.mxu0 0
  %335 = vmatpush1.bf16.msra.mxu0 %v266
  %336 = vmatprep.subr.bf16.mxu0 0
  %337 = vmatpush1.bf16.msra.mxu0 %v267
  %338 = vmatprep.subr.bf16.mxu0 0
  %339 = vmatpush1.bf16.msra.mxu0 %v268
  %340 = vmatprep.subr.bf16.mxu0 0
  %341 = vmatpush1.bf16.msra.mxu0 %v269
  %342 = vmatprep.subr.bf16.mxu0 0
  %343 = vmatpush1.bf16.msra.mxu0 %v270
  %344 = vmatprep.subr.bf16.mxu0 0
  %345 = vmatpush1.bf16.msra.mxu0 %v271
  %346 = vmatprep.subr.bf16.mxu0 0
  %347 = vmatpush1.bf16.msra.mxu0 %v272
  %348 = vmatprep.subr.bf16.mxu0 0
  %349 = vmatpush1.bf16.msra.mxu0 %v273
  %350 = vmatprep.subr.bf16.mxu0 0
  %351 = vmatpush1.bf16.msra.mxu0 %v274
  %352 = vmatprep.subr.bf16.mxu0 0
  %353 = vmatpush1.bf16.msra.mxu0 %v275
  %354 = vmatprep.subr.bf16.mxu0 0
  %355 = vmatpush1.bf16.msra.mxu0 %v276
  %356 = vmatprep.subr.bf16.mxu0 0
  %357 = vmatpush1.bf16.msra.mxu0 %v277
  %358 = vmatprep.mubr.bf16.mxu0 %v119
  %359 = vmatmul.mubr.bf16.gmra.mrb[0].mxu0 %v118
  %v360 = vpop.f32.mrb[0].mxu0
  %v361 = vadd.f32 %v92, %v360
  %v362 = vpop.f32.mrb[0].mxu0
  %v363 = vpop.f32.mrb[0].mxu0
  %v364 = vadd.f32 %v92, %v363
  %v365 = vpop.f32.mrb[0].mxu0
  %366 = vmatprep.mubr.bf16.mxu0 %v123
  %367 = vmatmul.mubr.bf16.gmra.mrb[0].mxu0 %v122
  %v368 = vpop.f32.mrb[0].mxu0
  %v369 = vadd.f32 %v92, %v368
  %v370 = vpop.f32.mrb[0].mxu0
  %v371 = vpop.f32.mrb[0].mxu0
  %v372 = vadd.f32 %v92, %v371
  %v373 = vpop.f32.mrb[0].mxu0
  %374 = vdwg.mxu0
  %375 = vmatprep.subr.bf16.mxu0 0
  %376 = vmatpush1.bf16.msra.mxu0 %v278
  %377 = vmatprep.subr.bf16.mxu0 0
  %378 = vmatpush1.bf16.msra.mxu0 %v279
  %379 = vmatprep.subr.bf16.mxu0 0
  %380 = vmatpush1.bf16.msra.mxu0 %v280
  %381 = vmatprep.subr.bf16.mxu0 0
  %382 = vmatpush1.bf16.msra.mxu0 %v281
  %383 = vmatprep.subr.bf16.mxu0 0
  %384 = vmatpush1.bf16.msra.mxu0 %v282
  %385 = vmatprep.subr.bf16.mxu0 0
  %386 = vmatpush1.bf16.msra.mxu0 %v283
  %387 = vmatprep.subr.bf16.mxu0 0
  %388 = vmatpush1.bf16.msra.mxu0 %v284
  %389 = vmatprep.subr.bf16.mxu0 0
  %390 = vmatpush1.bf16.msra.mxu0 %v285
  %391 = vmatprep.subr.bf16.mxu0 0
  %392 = vmatpush1.bf16.msra.mxu0 %v286
  %393 = vmatprep.subr.bf16.mxu0 0
  %394 = vmatpush1.bf16.msra.mxu0 %v287
  %395 = vmatprep.subr.bf16.mxu0 0
  %396 = vmatpush1.bf16.msra.mxu0 %v288
  %397 = vmatprep.subr.bf16.mxu0 0
  %398 = vmatpush1.bf16.msra.mxu0 %v289
  %399 = vmatprep.subr.bf16.mxu0 0
  %400 = vmatpush1.bf16.msra.mxu0 %v290
  %401 = vmatprep.subr.bf16.mxu0 0
  %402 = vmatpush1.bf16.msra.mxu0 %v291
  %403 = vmatprep.subr.bf16.mxu0 0
  %404 = vmatpush1.bf16.msra.mxu0 %v292
  %405 = vmatprep.subr.bf16.mxu0 0
  %406 = vmatpush1.bf16.msra.mxu0 %v293
  %407 = vmatprep.mubr.bf16.mxu0 %v121
  %408 = vmatmul.mubr.bf16.gmra.mrb[0].mxu0 %v120
  %v409 = vpop.f32.mrb[0].mxu0
  %v410 = vadd.f32 %v361, %v409
  %v411 = vpop.f32.mrb[0].mxu0
  %v412 = vpop.f32.mrb[0].mxu0
  %v413 = vadd.f32 %v364, %v412
  %v414 = vpop.f32.mrb[0].mxu0
  %415 = vmatprep.mubr.bf16.mxu0 %v125
  %416 = vmatmul.mubr.bf16.gmra.mrb[0].mxu0 %v124
  %v417 = vpop.f32.mrb[0].mxu0
  %v418 = vadd.f32 %v369, %v417
  %v419 = vpop.f32.mrb[0].mxu0
  %v420 = vpop.f32.mrb[0].mxu0
  %v421 = vadd.f32 %v372, %v420
  %v422 = vpop.f32.mrb[0].mxu0
  %423 = vdwg.mxu0
  %v424 = vmax.f32 %v410, 0.0
  %v425 = vmax.f32 %v413, 0.0
  %v426 = vmax.f32 %v418, 0.0
  %v427 = vmax.f32 %v421, 0.0
  %v428 = vpack.c.bf16 %v425, %v424
  %v429 = vpack.c.bf16 %v427, %v426
  %v432 = vunpack.c.l.b16 %v428
  %v433 = vunpack.c.h.b16 %v428
  %v434 = vunpack.c.l.b16 %v429
  %v435 = vunpack.c.h.b16 %v429
  %v436 = vpack.c.b16 %v432, %v432
  %v437 = vpack.c.b16 %v433, %v433
  %v438 = vpack.c.b16 %v434, %v434
  %v439 = vpack.c.b16 %v435, %v435
  %444 = vst [vmem:[%s3] sm:$0xf] %v436
  %445 = vst [vmem:[%s3 + $0x4] sm:$0xf] %v437
  %446 = vst [vmem:[%s3 + $0x8] sm:$0xf] %v438
  %447 = vst [vmem:[%s3 + $0xc] sm:$0xf] %v439
  // Predicated region
  $region14: #{dqn_forward_pallas.6} parent=0 // pred_check
    _
  $region15: #{dqn_forward_pallas.6} parent=0 // pred_check_branch
    %449 = sbr.rel (0) target = $region17
  $region16: #{dqn_forward_pallas.6} parent=0 // pred_region
    _
  $region17: #{dqn_forward_pallas.6} parent=0 // pred_fallthru
    _
  // Predicated region
  $region18: #{dqn_forward_pallas.6} parent=0 // pred_check
    _
  $region19: #{dqn_forward_pallas.6} parent=0 // pred_check_branch
    %451 = sbr.rel (0) target = $region21
  $region20: #{dqn_forward_pallas.6} parent=0 // pred_region
    _
  $region21: #{dqn_forward_pallas.6} parent=0 // pred_fallthru
    _

// kernel: dqn_forward_pallas.8
$region0: #{dqn_forward_pallas.8}
  #allocation0 [shape = 'u32[]', space=smem, size = 0x4, offset = 0x4, fixed_abs, tag = 'smem constant byte address 0x4 - core index']
  #allocation1 [shape = 'u32[144,128]{1,0:T(1,128)}', space=vmem, size = 0x12000, scoped, tag = 'internal scratch']
  %s0 = inlined_call_operand.vmem [shape: bf16[16,64], index: 0, kind: input, shape index: {}]
  %s1 = inlined_call_operand.vmem [shape: bf16[64,512], index: 1, kind: input, shape index: {}]
  %s2 = inlined_call_operand.vmem [shape: f32[1,512], index: 2, kind: input, shape index: {}]
  %s3 = inlined_call_operand.vmem [shape: bf16[16,512], index: 3, kind: output, shape index: {}]
  %s4 = sld [smem:[#allocation0]]
  $region117: #{dqn_forward_pallas.8} parent=0
    _
  %s6 = ssub.s32 1, %s4
  %s7 = scalar_select 0, %s6, %s4
  $region1: #{dqn_forward_pallas.8} parent=0
    #allocation2 [shape = 'u8[65536]{0}', space=vmem, size = 0x10000, scoped, tag = 'input window, operand 1']
    #allocation3 [shape = 'u8[16384]{0}', space=vmem, size = 0x4000, scoped, tag = 'output window, operand 0']
    loop: start=0, step=1, limit=4
    $region2: #{dqn_forward_pallas.8} parent=1 // loop_pre_header
      _
    $region3: #{dqn_forward_pallas.8} parent=1 // loop_header
      %s9 = sphi 0, %s13
      %p10 = scmp.ge.s32.totalorder %s9, 4
      %s16 = sphi 0, %s28
      %s17 = sphi 0, %s24
      %s18 = sphi 0, %s16
      %s19 = sphi 0, %s17
      %s20 = sphi 0, %s18
      %s21 = sphi 0, %s19
      %s31 = sphi 0, %s33
      %s34 = sphi 0, %s31
      %s35 = sphi 0, %s34
      %s51 = sphi 0, %s35
      %s57 = sphi 0, %s59
      %s60 = sphi 0, %s57
      %s61 = sphi 0, %s60
      %s77 = sphi 0, %s61
      %s83 = sphi 0, %s85
      %s86 = sphi 0, %s83
      %s87 = sphi 0, %s86
      %s103 = sphi 0, %s87
      %s111 = sphi 0, %s113
      %s114 = sphi 0, %s111
      %s115 = sphi 0, %s114
      %s131 = sphi 0, %s115
    $region4: #{dqn_forward_pallas.8} parent=1 // loop_header_branch
      %12 = sbr.rel (%p10) target = $region8
    $region5: #{dqn_forward_pallas.8} parent=1 // loop_body
      %s14 = ssub.s32 %s9, 1
      %s15 = ssub.s32 %s9, 2
      %s22 = sadd.s32 1, %s17
      %p23 = scmp.ge.s32.totalorder %s22, 2
      %s24 = scalar_select %p23, 0, %s22
      %s25 = sadd.s32 1, %s16
      %s26 = scalar_select %p23, %s25, %s16
      %p27 = scmp.ge.s32.totalorder %s26, 1
      %s28 = scalar_select %p27, 0, %s26
      %s29 = ssub.s32 %s16, %s28
      %p30 = scmp.eq.s32.totalorder %s29, 0
      %s32 = sadd.s32 %s31, 1
      %s33 = scalar_select %p30, %s31, %s32
      %p36 = pneg %p30
      %p37 = scmp.eq.s32.totalorder %s9, 1
      %p38 = por %p36, %p37
      %p39 = scmp.ne.s32.totalorder %s31, %s34
      %p40 = scmp.eq.s32.totalorder %s9, 0
      %p41 = por %p39, %p40
      %p42 = scmp.ne.s32.totalorder %s31, %s34
      %p43 = scmp.eq.s32.totalorder %s14, 1
      %p44 = por %p42, %p43
      %p45 = scmp.ne.s32.totalorder %s34, %s35
      %p46 = scmp.eq.s32.totalorder %s14, 0
      %p47 = por %p45, %p46
      %p48 = scmp.ne.s32.totalorder %s34, %s35
      %p49 = scmp.eq.s32.totalorder %s15, 1
      %p50 = por %p48, %p49
      %p52 = scmp.ne.s32.totalorder %s35, %s51
      %p53 = scmp.eq.s32.totalorder %s15, 0
      %p54 = por %p52, %p53
      %s55 = ssub.s32 %s17, %s24
      %p56 = scmp.eq.s32.totalorder %s55, 0
      %s58 = sadd.s32 %s57, 1
      %s59 = scalar_select %p56, %s57, %s58
      %p62 = pneg %p56
      %p63 = scmp.eq.s32.totalorder %s9, 1
      %p64 = por %p62, %p63
      %p65 = scmp.ne.s32.totalorder %s57, %s60
      %p66 = scmp.eq.s32.totalorder %s9, 0
      %p67 = por %p65, %p66
      %p68 = scmp.ne.s32.totalorder %s57, %s60
      %p69 = scmp.eq.s32.totalorder %s14, 1
      %p70 = por %p68, %p69
      %p71 = scmp.ne.s32.totalorder %s60, %s61
      %p72 = scmp.eq.s32.totalorder %s14, 0
      %p73 = por %p71, %p72
      %p74 = scmp.ne.s32.totalorder %s60, %s61
      %p75 = scmp.eq.s32.totalorder %s15, 1
      %p76 = por %p74, %p75
      %p78 = scmp.ne.s32.totalorder %s61, %s77
      %p79 = scmp.eq.s32.totalorder %s15, 0
      %p80 = por %p78, %p79
      %s81 = ssub.s32 %s17, %s24
      %p82 = scmp.eq.s32.totalorder %s81, 0
      %s84 = sadd.s32 %s83, 1
      %s85 = scalar_select %p82, %s83, %s84
      %p88 = pneg %p82
      %p89 = scmp.eq.s32.totalorder %s9, 1
      %p90 = por %p88, %p89
      %p91 = scmp.ne.s32.totalorder %s83, %s86
      %p92 = scmp.eq.s32.totalorder %s9, 0
      %p93 = por %p91, %p92
      %p94 = scmp.ne.s32.totalorder %s83, %s86
      %p95 = scmp.eq.s32.totalorder %s14, 1
      %p96 = por %p94, %p95
      %p97 = scmp.ne.s32.totalorder %s86, %s87
      %p98 = scmp.eq.s32.totalorder %s14, 0
      %p99 = por %p97, %p98
      %p100 = scmp.ne.s32.totalorder %s86, %s87
      %p101 = scmp.eq.s32.totalorder %s15, 1
      %p102 = por %p100, %p101
      %p104 = scmp.ne.s32.totalorder %s87, %s103
      %p105 = scmp.eq.s32.totalorder %s15, 0
      %p106 = por %p104, %p105
      %s107 = ssub.s32 %s16, %s28
      %s108 = ssub.s32 %s17, %s24
      %s109 = sor.u32 %s107, %s108
      %p110 = scmp.eq.s32.totalorder %s109, 0
      %s112 = sadd.s32 %s111, 1
      %s113 = scalar_select %p110, %s111, %s112
      %p116 = pneg %p110
      %p117 = scmp.eq.s32.totalorder %s9, 1
      %p118 = por %p116, %p117
      %p119 = scmp.ne.s32.totalorder %s111, %s114
      %p120 = scmp.eq.s32.totalorder %s9, 0
      %p121 = por %p119, %p120
      %p122 = scmp.ne.s32.totalorder %s111, %s114
      %p123 = scmp.eq.s32.totalorder %s14, 1
      %p124 = por %p122, %p123
      %p125 = scmp.ne.s32.totalorder %s114, %s115
      %p126 = scmp.eq.s32.totalorder %s14, 0
      %p127 = por %p125, %p126
      %p128 = scmp.ne.s32.totalorder %s114, %s115
      %p129 = scmp.eq.s32.totalorder %s15, 1
      %p130 = por %p128, %p129
      %p132 = scmp.ne.s32.totalorder %s115, %s131
      %p133 = scmp.eq.s32.totalorder %s15, 0
      %p134 = por %p132, %p133
      %p135 = scmp.le.s32.totalorder 1, %s9
      %p136 = scmp.lt.s32.totalorder %s9, 3
      %p137 = pnand %p135, %p136
      %p138 = pneg %p137
      // Predicated region
      $region9: #{dqn_forward_pallas.8} parent=5 // pred_check
        _
      $region10: #{dqn_forward_pallas.8} parent=5 // pred_check_branch
        %140 = sbr.rel (%p137) target = $region12
      $region11: #{dqn_forward_pallas.8} parent=5 // pred_region
        %s141 = ssub.s32 %s9, 1
        // Predicated region
        $region13: #{dqn_forward_pallas.8} parent=11 // pred_check
          %p142 = pneg %p47
        $region14: #{dqn_forward_pallas.8} parent=11 // pred_check_branch
          %144 = sbr.rel (%p142) target = $region16
        $region15: #{dqn_forward_pallas.8} parent=11 // pred_region
          %s145 = smul.u32 2, %s18
          %p146 = scmp.lt.s32.totalorder %s145, 1
          %s147 = scalar_select %p146, %s145, 1
          %s148 = smul.addr %s147, 4
          %s149 = scalar_lea.vmem %s0, %s148
          %s150 = smul.u32 2, %s18
        $region16: #{dqn_forward_pallas.8} parent=11 // pred_fallthru
          _
      $region12: #{dqn_forward_pallas.8} parent=5 // pred_fallthru
        _
      %p151 = scmp.lt.s32.totalorder %s9, 2
      // Predicated region
      $region17: #{dqn_forward_pallas.8} parent=5 // pred_check
        %p152 = pneg %p151
      $region18: #{dqn_forward_pallas.8} parent=5 // pred_check_branch
        %154 = sbr.rel (%p152) target = $region20
      $region19: #{dqn_forward_pallas.8} parent=5 // pred_region
        // Predicated region
        $region21: #{dqn_forward_pallas.8} parent=19 // pred_check
          %p155 = pneg %p67
        $region22: #{dqn_forward_pallas.8} parent=19 // pred_check_branch
          %157 = sbr.rel (%p155) target = $region24
        $region23: #{dqn_forward_pallas.8} parent=19 // pred_region
          %s158 = sand.u32 %s57, 1
          %s159 = sand.u32 %s57, 1
          %s160 = smul.addr %s159, 64
          %s161 = scalar_lea.vmem [#allocation2], %s160
          %s162 = smul.u32 2, %s17
          %s163 = smul.addr %s162, 4
          %s164 = scalar_lea.vmem %s1, %s163
          // Predicated region
          $region25: #{dqn_forward_pallas.8} parent=23 // pred_check
            _
          $region26: #{dqn_forward_pallas.8} parent=23 // pred_check_branch
            %166 = sbr.rel (0) target = $region28
          $region27: #{dqn_forward_pallas.8} parent=23 // pred_region
            // Predicated region
            $region29: #{dqn_forward_pallas.8} parent=27 // pred_check
              _
            $region30: #{dqn_forward_pallas.8} parent=27 // pred_check_branch
              %168 = sbr.rel (0) target = $region32
            $region31: #{dqn_forward_pallas.8} parent=27 // pred_region
              // Predicated region
              $region44: #{dqn_forward_pallas.8} parent=31 // pred_check
                _
              $region45: #{dqn_forward_pallas.8} parent=31 // pred_check_branch
                %197 = sbr.rel (0) target = $region47
              $region46: #{dqn_forward_pallas.8} parent=31 // pred_region
                loop: start=0, step=1, limit=1
                $region48: #{dqn_forward_pallas.8} parent=46 // loop_pre_header
                  _
                $region49: #{dqn_forward_pallas.8} parent=46 // loop_header
                  %s199 = sphi 0, %s203
                  %p200 = scmp.ge.s32.totalorder %s199, 1
                  %s204 = sphi %s164, %s164
                  %s205 = sphi %s161, %s161
                $region50: #{dqn_forward_pallas.8} parent=46 // loop_header_branch
                  %202 = sbr.rel (%p200) target = $region54
                $region51: #{dqn_forward_pallas.8} parent=46 // loop_body
                  %v206 = vld [vmem:[%s204] sm:$0xff]
                  %207 = vst [vmem:[%s205] sm:$0xff] %v206
                  %v208 = vld [vmem:[%s204 + $0x10] sm:$0xff]
                  %209 = vst [vmem:[%s205 + $0x8] sm:$0xff] %v208
                  %v210 = vld [vmem:[%s204 + $0x20] sm:$0xff]
                  %211 = vst [vmem:[%s205 + $0x10] sm:$0xff] %v210
                  %v212 = vld [vmem:[%s204 + $0x30] sm:$0xff]
                  %213 = vst [vmem:[%s205 + $0x18] sm:$0xff] %v212
                  %v214 = vld [vmem:[%s204 + $0x40] sm:$0xff]
                  %215 = vst [vmem:[%s205 + $0x20] sm:$0xff] %v214
                  %v216 = vld [vmem:[%s204 + $0x50] sm:$0xff]
                  %217 = vst [vmem:[%s205 + $0x28] sm:$0xff] %v216
                  %v218 = vld [vmem:[%s204 + $0x60] sm:$0xff]
                  %219 = vst [vmem:[%s205 + $0x30] sm:$0xff] %v218
                  %v220 = vld [vmem:[%s204 + $0x70] sm:$0xff]
                  %221 = vst [vmem:[%s205 + $0x38] sm:$0xff] %v220
                $region52: #{dqn_forward_pallas.8} parent=46 // loop_footer
                  %s203 = sadd.s32 1, %s199
                $region53: #{dqn_forward_pallas.8} parent=46 // loop_footer_branch
                  %198 = sbr.rel target = $region49
                $region54: #{dqn_forward_pallas.8} parent=46 // loop_exit
                  _
              $region47: #{dqn_forward_pallas.8} parent=31 // pred_fallthru
                _
              // Predicated region
              $region55: #{dqn_forward_pallas.8} parent=31 // pred_check
                _
              $region56: #{dqn_forward_pallas.8} parent=31 // pred_check_branch
                %223 = sbr.rel target = $region58
              $region57: #{dqn_forward_pallas.8} parent=31 // pred_region
                _
              $region58: #{dqn_forward_pallas.8} parent=31 // pred_fallthru
                _
            $region32: #{dqn_forward_pallas.8} parent=27 // pred_fallthru
              _
            // Predicated region
            $region33: #{dqn_forward_pallas.8} parent=27 // pred_check
              _
            $region34: #{dqn_forward_pallas.8} parent=27 // pred_check_branch
              %170 = sbr.rel target = $region36
            $region35: #{dqn_forward_pallas.8} parent=27 // pred_region
              loop: start=0, step=1, limit=1
              $region37: #{dqn_forward_pallas.8} parent=35 // loop_pre_header
                _
              $region38: #{dqn_forward_pallas.8} parent=35 // loop_header
                %s173 = sphi 0, %s177
                %p174 = scmp.ge.s32.totalorder %s173, 1
                %s178 = sphi %s164, %s164
                %s179 = sphi %s161, %s161
              $region39: #{dqn_forward_pallas.8} parent=35 // loop_header_branch
                %176 = sbr.rel (%p174) target = $region43
              $region40: #{dqn_forward_pallas.8} parent=35 // loop_body
                %v180 = vld [vmem:[%s178] sm:$0xff]
                %181 = vst [vmem:[%s179] sm:$0xff] %v180
                %v182 = vld [vmem:[%s178 + $0x10] sm:$0xff]
                %183 = vst [vmem:[%s179 + $0x8] sm:$0xff] %v182
                %v184 = vld [vmem:[%s178 + $0x20] sm:$0xff]
                %185 = vst [vmem:[%s179 + $0x10] sm:$0xff] %v184
                %v186 = vld [vmem:[%s178 + $0x30] sm:$0xff]
                %187 = vst [vmem:[%s179 + $0x18] sm:$0xff] %v186
                %v188 = vld [vmem:[%s178 + $0x40] sm:$0xff]
                %189 = vst [vmem:[%s179 + $0x20] sm:$0xff] %v188
                %v190 = vld [vmem:[%s178 + $0x50] sm:$0xff]
                %191 = vst [vmem:[%s179 + $0x28] sm:$0xff] %v190
                %v192 = vld [vmem:[%s178 + $0x60] sm:$0xff]
                %193 = vst [vmem:[%s179 + $0x30] sm:$0xff] %v192
                %v194 = vld [vmem:[%s178 + $0x70] sm:$0xff]
                %195 = vst [vmem:[%s179 + $0x38] sm:$0xff] %v194
              $region41: #{dqn_forward_pallas.8} parent=35 // loop_footer
                %s177 = sadd.s32 1, %s173
              $region42: #{dqn_forward_pallas.8} parent=35 // loop_footer_branch
                %172 = sbr.rel target = $region38
              $region43: #{dqn_forward_pallas.8} parent=35 // loop_exit
                _
            $region36: #{dqn_forward_pallas.8} parent=27 // pred_fallthru
              _
          $region28: #{dqn_forward_pallas.8} parent=23 // pred_fallthru
            _
          %224 = vnop
        $region24: #{dqn_forward_pallas.8} parent=19 // pred_fallthru
          _
        // Predicated region
        $region59: #{dqn_forward_pallas.8} parent=19 // pred_check
          %p225 = pneg %p93
        $region60: #{dqn_forward_pallas.8} parent=19 // pred_check_branch
          %227 = sbr.rel (%p225) target = $region62
        $region61: #{dqn_forward_pallas.8} parent=19 // pred_region
          %s228 = smul.u32 2, %s17
          %p229 = scmp.lt.s32.totalorder %s228, 3
          %s230 = scalar_select %p229, %s228, 3
          %s231 = scalar_lea.vmem %s2, %s230
          %s232 = smul.u32 2, %s17
        $region62: #{dqn_forward_pallas.8} parent=19 // pred_fallthru
          _
      $region20: #{dqn_forward_pallas.8} parent=5 // pred_fallthru
        _
      %p233 = scmp.le.s32.totalorder 1, %s9
      %p234 = scmp.lt.s32.totalorder %s9, 3
      %p235 = pnand %p233, %p234
      %p236 = pneg %p235
      // Predicated region
      $region63: #{dqn_forward_pallas.8} parent=5 // pred_check
        _
      $region64: #{dqn_forward_pallas.8} parent=5 // pred_check_branch
        %238 = sbr.rel (%p235) target = $region66
      $region65: #{dqn_forward_pallas.8} parent=5 // pred_region
        %s239 = ssub.s32 %s9, 1
        %s240 = sand.u32 %s60, 1
        %s241 = sand.u32 %s60, 1
        %s242 = smul.addr %s241, 64
        %s243 = scalar_lea.vmem [#allocation2], %s242
        // Predicated region
        $region67: #{dqn_forward_pallas.8} parent=65 // pred_check
          %p244 = pneg %p73
        $region68: #{dqn_forward_pallas.8} parent=65 // pred_check_branch
          %246 = sbr.rel (%p244) target = $region70
        $region69: #{dqn_forward_pallas.8} parent=65 // pred_region
          _
        $region70: #{dqn_forward_pallas.8} parent=65 // pred_fallthru
          _
        %s247 = smul.u32 2, %s18
        %p248 = scmp.lt.s32.totalorder %s247, 1
        %s249 = scalar_select %p248, %s247, 1
        %s250 = smul.addr %s249, 4
        %s251 = scalar_lea.vmem %s0, %s250
        %p252 = pneg %p47
        %p253 = pneg %p44
        %s254 = sand.u32 %s60, 1
        %s255 = sand.u32 %s60, 1
        %s256 = smul.addr %s255, 64
        %s257 = scalar_lea.vmem [#allocation2], %s256
        %p258 = pneg %p73
        %p259 = pneg %p70
        %s260 = smul.u32 2, %s19
        %p261 = scmp.lt.s32.totalorder %s260, 3
        %s262 = scalar_select %p261, %s260, 3
        %s263 = scalar_lea.vmem %s2, %s262
        %p264 = pneg %p99
        %p265 = pneg %p96
        %p266 = pneg %p127
        %p267 = pneg %p124
        %s268 = sand.u32 %s114, 1
        %s269 = sand.u32 %s114, 1
        %s270 = smul.addr %s269, 16
        %s271 = scalar_lea.vmem [#allocation3], %s270
        %s272 = smul.u32 2, %s18
        %p273 = scmp.lt.s32.totalorder %s272, 1
        %s274 = scalar_select %p273, %s272, 1
        %s275 = smul.addr %s274, 4
        %s276 = scalar_lea.vmem %s0, %s275
        %s277 = smul.u32 2, %s18
        %s278 = smul.u32 2, %s19
        %s279 = smul.u32 2, %s19
        %p280 = scmp.lt.s32.totalorder %s279, 3
        %s281 = scalar_select %p280, %s279, 3
        %s282 = scalar_lea.vmem %s2, %s281
        %s283 = smul.u32 2, %s19
        %s284 = smul.u32 2, %s18
        %s285 = smul.u32 2, %s19
        %v287 = vld [vmem:[%s276] sm:$0xf]
        %v288 = vld [vmem:[%s276 + $0x4] sm:$0xf]
        %v289 = vld [vmem:[%s243] sm:$0xff]
        %v290 = vld [vmem:[%s243 + $0x8] sm:$0xff]
        %v291 = vld [vmem:[%s243 + $0x10] sm:$0xff]
        %v292 = vld [vmem:[%s243 + $0x18] sm:$0xff]
        %v293 = vld [vmem:[%s243 + $0x20] sm:$0xff]
        %v294 = vld [vmem:[%s243 + $0x28] sm:$0xff]
        %v295 = vld [vmem:[%s243 + $0x30] sm:$0xff]
        %v296 = vld [vmem:[%s243 + $0x38] sm:$0xff]
        %v297 = vld [vmem:[%s282] sm:$0x3]
        %v299 = vlaneseq
        %v300 = vshrl.u32 %v299, 7
        %v301 = vsub.s32 0, %v300
        %v302 = vrot.slane %v297, %v301
        %v303 = vlaneseq
        %v304 = vshrl.u32 %v303, 7
        %v305 = vsub.s32 1, %v304
        %v306 = vrot.slane %v297, %v305
        %v311 = vunpack.c.l.b16 %v287
        %v312 = vunpack.c.l.b16 %v288
        %v313 = vpack.c.b16 %v312, %v311
        %v322 = vunpack.c.l.b16 %v289
        %v323 = vunpack.c.h.b16 %v289
        %v324 = vunpack.c.l.b16 %v290
        %v325 = vunpack.c.h.b16 %v290
        %v326 = vunpack.c.l.b16 %v291
        %v327 = vunpack.c.h.b16 %v291
        %v328 = vunpack.c.l.b16 %v292
        %v329 = vunpack.c.h.b16 %v292
        %v330 = vunpack.c.l.b16 %v293
        %v331 = vunpack.c.h.b16 %v293
        %v332 = vunpack.c.l.b16 %v294
        %v333 = vunpack.c.h.b16 %v294
        %v334 = vunpack.c.l.b16 %v295
        %v335 = vunpack.c.h.b16 %v295
        %v336 = vunpack.c.l.b16 %v296
        %v337 = vunpack.c.h.b16 %v296
        %v338 = vpack.c.b16 %v324, %v322
        %v339 = vpack.c.b16 %v325, %v323
        %v340 = vpack.c.b16 %v328, %v326
        %v341 = vpack.c.b16 %v329, %v327
        %v342 = vpack.c.b16 %v332, %v330
        %v343 = vpack.c.b16 %v333, %v331
        %v344 = vpack.c.b16 %v336, %v334
        %v345 = vpack.c.b16 %v337, %v335
        %vm354 = vcmask 523264
        %v356 = vsel %vm354, %v313, 0
        %358 = vmatprep.subr.bf16.mxu0 %v339
        %359 = vmatpush1.bf16.msra.mxu0 %v338
        %360 = vmatprep.subr.bf16.mxu0 %v341
        %361 = vmatpush1.bf16.msra.mxu0 %v340
        %362 = vmatprep.subr.bf16.mxu0 %v343
        %363 = vmatpush1.bf16.msra.mxu0 %v342
        %364 = vmatprep.subr.bf16.mxu0 %v345
        %365 = vmatpush1.bf16.msra.mxu0 %v344
        %366 = vmatprep.subr.bf16.mxu0 0
        %367 = vmatpush1.bf16.msra.mxu0 0
        %368 = vmatprep.subr.bf16.mxu0 0
        %369 = vmatpush1.bf16.msra.mxu0 0
        %370 = vmatprep.subr.bf16.mxu0 0
        %371 = vmatpush1.bf16.msra.mxu0 0
        %372 = vmatprep.subr.bf16.mxu0 0
        %373 = vmatpush1.bf16.msra.mxu0 0
        %374 = vmatprep.subr.bf16.mxu0 0
        %375 = vmatpush1.bf16.msra.mxu0 0
        %376 = vmatprep.subr.bf16.mxu0 0
        %377 = vmatpush1.bf16.msra.mxu0 0
        %378 = vmatprep.subr.bf16.mxu0 0
        %379 = vmatpush1.bf16.msra.mxu0 0
        %380 = vmatprep.subr.bf16.mxu0 0
        %381 = vmatpush1.bf16.msra.mxu0 0
        %382 = vmatprep.subr.bf16.mxu0 0
        %383 = vmatpush1.bf16.msra.mxu0 0
        %384 = vmatprep.subr.bf16.mxu0 0
        %385 = vmatpush1.bf16.msra.mxu0 0
        %386 = vmatprep.subr.bf16.mxu0 0
        %387 = vmatpush1.bf16.msra.mxu0 0
        %388 = vmatprep.subr.bf16.mxu0 0
        %389 = vmatpush1.bf16.msra.mxu0 0
        %390 = vmatprep.mubr.bf16.mxu0 0
        %391 = vmatmul.mubr.bf16.gmra.mrb[0].mxu0 %v356
        %v392 = vpop.f32.mrb[0].mxu0
        %v393 = vadd.f32 %v302, %v392
        %v394 = vpop.f32.mrb[0].mxu0
        %v395 = vadd.f32 %v306, %v394
        %v396 = vpop.f32.mrb[0].mxu0
        %v397 = vadd.f32 %v302, %v396
        %v398 = vpop.f32.mrb[0].mxu0
        %v399 = vadd.f32 %v306, %v398
        %400 = vdwg.mxu0
        %v401 = vmax.f32 %v393, 0.0
        %v402 = vmax.f32 %v395, 0.0
        %v403 = vmax.f32 %v397, 0.0
        %v404 = vmax.f32 %v399, 0.0
        %v405 = vpack.c.bf16 %v403, %v401
        %v406 = vpack.c.bf16 %v404, %v402
        %v409 = vunpack.c.l.b16 %v405
        %v410 = vunpack.c.l.b16 %v406
        %v411 = vunpack.c.h.b16 %v405
        %v412 = vunpack.c.h.b16 %v406
        %v413 = vpack.c.b16 %v410, %v409
        %v414 = vpack.c.b16 %v412, %v411
        %417 = vst [vmem:[%s271] sm:$0xff] %v413
        %418 = vst [vmem:[%s271 + $0x8] sm:$0xff] %v414
        %s419 = sand.u32 %s114, 1
        %s420 = sand.u32 %s114, 1
        %s421 = smul.addr %s420, 16
        %s422 = scalar_lea.vmem [#allocation3], %s421
        // Predicated region
        $region71: #{dqn_forward_pallas.8} parent=65 // pred_check
          %p423 = pneg %p124
        $region72: #{dqn_forward_pallas.8} parent=65 // pred_check_branch
          %425 = sbr.rel (%p423) target = $region74
        $region73: #{dqn_forward_pallas.8} parent=65 // pred_region
          %s426 = smul.u32 2, %s18
          %s427 = smul.u32 2, %s19
          %s428 = smul.addr %s426, 4
          %s429 = sadd.s32 %s427, %s428
          %s430 = smul.addr %s429, 4
          %s431 = scalar_lea.vmem %s3, %s430
          // Predicated region
          $region75: #{dqn_forward_pallas.8} parent=73 // pred_check
            _
          $region76: #{dqn_forward_pallas.8} parent=73 // pred_check_branch
            %433 = sbr.rel (0) target = $region78
          $region77: #{dqn_forward_pallas.8} parent=73 // pred_region
            // Predicated region
            $region79: #{dqn_forward_pallas.8} parent=77 // pred_check
              _
            $region80: #{dqn_forward_pallas.8} parent=77 // pred_check_branch
              %435 = sbr.rel (0) target = $region82
            $region81: #{dqn_forward_pallas.8} parent=77 // pred_region
              // Predicated region
              $region94: #{dqn_forward_pallas.8} parent=81 // pred_check
                _
              $region95: #{dqn_forward_pallas.8} parent=81 // pred_check_branch
                %452 = sbr.rel (0) target = $region97
              $region96: #{dqn_forward_pallas.8} parent=81 // pred_region
                loop: start=0, step=1, limit=1
                $region98: #{dqn_forward_pallas.8} parent=96 // loop_pre_header
                  _
                $region99: #{dqn_forward_pallas.8} parent=96 // loop_header
                  %s454 = sphi 0, %s458
                  %p455 = scmp.ge.s32.totalorder %s454, 1
                  %s459 = sphi %s422, %s422
                  %s460 = sphi %s431, %s431
                $region100: #{dqn_forward_pallas.8} parent=96 // loop_header_branch
                  %457 = sbr.rel (%p455) target = $region104
                $region101: #{dqn_forward_pallas.8} parent=96 // loop_body
                  %v461 = vld [vmem:[%s459] sm:$0xff]
                  %462 = vst [vmem:[%s460] sm:$0xff] %v461
                  %v463 = vld [vmem:[%s459 + $0x8] sm:$0xff]
                  %464 = vst [vmem:[%s460 + $0x10] sm:$0xff] %v463
                $region102: #{dqn_forward_pallas.8} parent=96 // loop_footer
                  %s458 = sadd.s32 1, %s454
                $region103: #{dqn_forward_pallas.8} parent=96 // loop_footer_branch
                  %453 = sbr.rel target = $region99
                $region104: #{dqn_forward_pallas.8} parent=96 // loop_exit
                  _
              $region97: #{dqn_forward_pallas.8} parent=81 // pred_fallthru
                _
              // Predicated region
              $region105: #{dqn_forward_pallas.8} parent=81 // pred_check
                _
              $region106: #{dqn_forward_pallas.8} parent=81 // pred_check_branch
                %466 = sbr.rel target = $region108
              $region107: #{dqn_forward_pallas.8} parent=81 // pred_region
                _
              $region108: #{dqn_forward_pallas.8} parent=81 // pred_fallthru
                _
            $region82: #{dqn_forward_pallas.8} parent=77 // pred_fallthru
              _
            // Predicated region
            $region83: #{dqn_forward_pallas.8} parent=77 // pred_check
              _
            $region84: #{dqn_forward_pallas.8} parent=77 // pred_check_branch
              %437 = sbr.rel target = $region86
            $region85: #{dqn_forward_pallas.8} parent=77 // pred_region
              loop: start=0, step=1, limit=1
              $region87: #{dqn_forward_pallas.8} parent=85 // loop_pre_header
                _
              $region88: #{dqn_forward_pallas.8} parent=85 // loop_header
                %s440 = sphi 0, %s444
                %p441 = scmp.ge.s32.totalorder %s440, 1
                %s445 = sphi %s422, %s422
                %s446 = sphi %s431, %s431
              $region89: #{dqn_forward_pallas.8} parent=85 // loop_header_branch
                %443 = sbr.rel (%p441) target = $region93
              $region90: #{dqn_forward_pallas.8} parent=85 // loop_body
                %v447 = vld [vmem:[%s445] sm:$0xff]
                %448 = vst [vmem:[%s446] sm:$0xff] %v447
                %v449 = vld [vmem:[%s445 + $0x8] sm:$0xff]
                %450 = vst [vmem:[%s446 + $0x10] sm:$0xff] %v449
              $region91: #{dqn_forward_pallas.8} parent=85 // loop_footer
                %s444 = sadd.s32 1, %s440
              $region92: #{dqn_forward_pallas.8} parent=85 // loop_footer_branch
                %439 = sbr.rel target = $region88
              $region93: #{dqn_forward_pallas.8} parent=85 // loop_exit
                _
            $region86: #{dqn_forward_pallas.8} parent=77 // pred_fallthru
              _
          $region78: #{dqn_forward_pallas.8} parent=73 // pred_fallthru
            _
          %467 = vnop
        $region74: #{dqn_forward_pallas.8} parent=65 // pred_fallthru
          _
      $region66: #{dqn_forward_pallas.8} parent=5 // pred_fallthru
        _
      %p468 = scmp.le.s32.totalorder 2, %s9
      // Predicated region
      $region109: #{dqn_forward_pallas.8} parent=5 // pred_check
        %p469 = pneg %p468
      $region110: #{dqn_forward_pallas.8} parent=5 // pred_check_branch
        %471 = sbr.rel (%p469) target = $region112
      $region111: #{dqn_forward_pallas.8} parent=5 // pred_region
        %s472 = ssub.s32 %s9, 2
        // Predicated region
        $region113: #{dqn_forward_pallas.8} parent=111 // pred_check
          %p473 = pneg %p130
        $region114: #{dqn_forward_pallas.8} parent=111 // pred_check_branch
          %475 = sbr.rel (%p473) target = $region116
        $region115: #{dqn_forward_pallas.8} parent=111 // pred_region
          %s476 = sand.u32 %s115, 1
          %s477 = sand.u32 %s115, 1
          %s478 = smul.addr %s477, 16
          %s479 = scalar_lea.vmem [#allocation3], %s478
        $region116: #{dqn_forward_pallas.8} parent=111 // pred_fallthru
          _
      $region112: #{dqn_forward_pallas.8} parent=5 // pred_fallthru
        _
    $region6: #{dqn_forward_pallas.8} parent=1 // loop_footer
      %s13 = sadd.s32 1, %s9
    $region7: #{dqn_forward_pallas.8} parent=1 // loop_footer_branch
      %8 = sbr.rel target = $region3
    $region8: #{dqn_forward_pallas.8} parent=1 // loop_exit
      _

// kernel: dqn_forward_pallas.7
$region0: #{dqn_forward_pallas.7}
  #allocation0 [shape = 'u32[]', space=smem, size = 0x4, offset = 0x4, fixed_abs, tag = 'smem constant byte address 0x4 - core index']
  #allocation1 [shape = 'u32[144,128]{1,0:T(1,128)}', space=vmem, size = 0x12000, scoped, tag = 'internal scratch']
  %s0 = inlined_call_operand.vmem [shape: bf16[16,576], index: 0, kind: input, shape index: {}]
  %s1 = inlined_call_operand.vmem [shape: bf16[576,128], index: 1, kind: input, shape index: {}]
  %s2 = inlined_call_operand.vmem [shape: f32[1,128], index: 2, kind: input, shape index: {}]
  %s3 = inlined_call_operand.vmem [shape: bf16[16,128], index: 3, kind: output, shape index: {}]
  %s4 = sld [smem:[#allocation0]]
  $region22: #{dqn_forward_pallas.7} parent=0
    _
  %s6 = ssub.s32 1, %s4
  %s7 = scalar_select 0, %s6, %s4
  // Predicated region
  $region2: #{dqn_forward_pallas.7} parent=0 // pred_check
    _
  $region3: #{dqn_forward_pallas.7} parent=0 // pred_check_branch
    %9 = sbr.rel (0) target = $region5
  $region4: #{dqn_forward_pallas.7} parent=0 // pred_region
    _
  $region5: #{dqn_forward_pallas.7} parent=0 // pred_fallthru
    _
  // Predicated region
  $region6: #{dqn_forward_pallas.7} parent=0 // pred_check
    _
  $region7: #{dqn_forward_pallas.7} parent=0 // pred_check_branch
    %11 = sbr.rel (0) target = $region9
  $region8: #{dqn_forward_pallas.7} parent=0 // pred_region
    _
  $region9: #{dqn_forward_pallas.7} parent=0 // pred_fallthru
    _
  // Predicated region
  $region10: #{dqn_forward_pallas.7} parent=0 // pred_check
    _
  $region11: #{dqn_forward_pallas.7} parent=0 // pred_check_branch
    %13 = sbr.rel (0) target = $region13
  $region12: #{dqn_forward_pallas.7} parent=0 // pred_region
    _
  $region13: #{dqn_forward_pallas.7} parent=0 // pred_fallthru
    _
  %v15 = vld [vmem:[%s0] sm:$0xff]
  %v16 = vld [vmem:[%s0 + $0x8] sm:$0xff]
  %v17 = vld [vmem:[%s0 + $0x10] sm:$0xf]
  %v18 = vld [vmem:[%s0 + $0x14] sm:$0xff]
  %v19 = vld [vmem:[%s0 + $0x1c] sm:$0xff]
  %v20 = vld [vmem:[%s0 + $0x24] sm:$0xf]
  %v21 = vld [vmem:[%s1] sm:$0xf]
  %v22 = vld [vmem:[%s1 + $0x4] sm:$0xf]
  %v23 = vld [vmem:[%s1 + $0x8] sm:$0xf]
  %v24 = vld [vmem:[%s1 + $0xc] sm:$0xf]
  %v25 = vld [vmem:[%s1 + $0x10] sm:$0xf]
  %v26 = vld [vmem:[%s1 + $0x14] sm:$0xf]
  %v27 = vld [vmem:[%s1 + $0x18] sm:$0xf]
  %v28 = vld [vmem:[%s1 + $0x1c] sm:$0xf]
  %v29 = vld [vmem:[%s1 + $0x20] sm:$0xf]
  %v30 = vld [vmem:[%s1 + $0x24] sm:$0xf]
  %v31 = vld [vmem:[%s1 + $0x28] sm:$0xf]
  %v32 = vld [vmem:[%s1 + $0x2c] sm:$0xf]
  %v33 = vld [vmem:[%s1 + $0x30] sm:$0xf]
  %v34 = vld [vmem:[%s1 + $0x34] sm:$0xf]
  %v35 = vld [vmem:[%s1 + $0x38] sm:$0xf]
  %v36 = vld [vmem:[%s1 + $0x3c] sm:$0xf]
  %v37 = vld [vmem:[%s1 + $0x40] sm:$0xf]
  %v38 = vld [vmem:[%s1 + $0x44] sm:$0xf]
  %v39 = vld [vmem:[%s1 + $0x48] sm:$0xf]
  %v40 = vld [vmem:[%s1 + $0x4c] sm:$0xf]
  %v41 = vld [vmem:[%s1 + $0x50] sm:$0xf]
  %v42 = vld [vmem:[%s1 + $0x54] sm:$0xf]
  %v43 = vld [vmem:[%s1 + $0x58] sm:$0xf]
  %v44 = vld [vmem:[%s1 + $0x5c] sm:$0xf]
  %v45 = vld [vmem:[%s1 + $0x60] sm:$0xf]
  %v46 = vld [vmem:[%s1 + $0x64] sm:$0xf]
  %v47 = vld [vmem:[%s1 + $0x68] sm:$0xf]
  %v48 = vld [vmem:[%s1 + $0x6c] sm:$0xf]
  %v49 = vld [vmem:[%s1 + $0x70] sm:$0xf]
  %v50 = vld [vmem:[%s1 + $0x74] sm:$0xf]
  %v51 = vld [vmem:[%s1 + $0x78] sm:$0xf]
  %v52 = vld [vmem:[%s1 + $0x7c] sm:$0xf]
  %v53 = vld [vmem:[%s1 + $0x80] sm:$0xf]
  %v54 = vld [vmem:[%s1 + $0x84] sm:$0xf]
  %v55 = vld [vmem:[%s1 + $0x88] sm:$0xf]
  %v56 = vld [vmem:[%s1 + $0x8c] sm:$0xf]
  %v57 = vld [vmem:[%s1 + $0x90] sm:$0xf]
  %v58 = vld [vmem:[%s1 + $0x94] sm:$0xf]
  %v59 = vld [vmem:[%s1 + $0x98] sm:$0xf]
  %v60 = vld [vmem:[%s1 + $0x9c] sm:$0xf]
  %v61 = vld [vmem:[%s1 + $0xa0] sm:$0xf]
  %v62 = vld [vmem:[%s1 + $0xa4] sm:$0xf]
  %v63 = vld [vmem:[%s1 + $0xa8] sm:$0xf]
  %v64 = vld [vmem:[%s1 + $0xac] sm:$0xf]
  %v65 = vld [vmem:[%s1 + $0xb0] sm:$0xf]
  %v66 = vld [vmem:[%s1 + $0xb4] sm:$0xf]
  %v67 = vld [vmem:[%s1 + $0xb8] sm:$0xf]
  %v68 = vld [vmem:[%s1 + $0xbc] sm:$0xf]
  %v69 = vld [vmem:[%s1 + $0xc0] sm:$0xf]
  %v70 = vld [vmem:[%s1 + $0xc4] sm:$0xf]
  %v71 = vld [vmem:[%s1 + $0xc8] sm:$0xf]
  %v72 = vld [vmem:[%s1 + $0xcc] sm:$0xf]
  %v73 = vld [vmem:[%s1 + $0xd0] sm:$0xf]
  %v74 = vld [vmem:[%s1 + $0xd4] sm:$0xf]
  %v75 = vld [vmem:[%s1 + $0xd8] sm:$0xf]
  %v76 = vld [vmem:[%s1 + $0xdc] sm:$0xf]
  %v77 = vld [vmem:[%s1 + $0xe0] sm:$0xf]
  %v78 = vld [vmem:[%s1 + $0xe4] sm:$0xf]
  %v79 = vld [vmem:[%s1 + $0xe8] sm:$0xf]
  %v80 = vld [vmem:[%s1 + $0xec] sm:$0xf]
  %v81 = vld [vmem:[%s1 + $0xf0] sm:$0xf]
  %v82 = vld [vmem:[%s1 + $0xf4] sm:$0xf]
  %v83 = vld [vmem:[%s1 + $0xf8] sm:$0xf]
  %v84 = vld [vmem:[%s1 + $0xfc] sm:$0xf]
  %v85 = vld [vmem:[%s1 + $0x100] sm:$0xf]
  %v86 = vld [vmem:[%s1 + $0x104] sm:$0xf]
  %v87 = vld [vmem:[%s1 + $0x108] sm:$0xf]
  %v88 = vld [vmem:[%s1 + $0x10c] sm:$0xf]
  %v89 = vld [vmem:[%s1 + $0x110] sm:$0xf]
  %v90 = vld [vmem:[%s1 + $0x114] sm:$0xf]
  %v91 = vld [vmem:[%s1 + $0x118] sm:$0xf]
  %v92 = vld [vmem:[%s1 + $0x11c] sm:$0xf]
  %v93 = vld [vmem:[%s2] sm:$0x1]
  %v95 = vlaneseq
  %v96 = vshrl.u32 %v95, 7
  %v97 = vsub.s32 0, %v96
  %v98 = vrot.slane %v93, %v97
  %v106 = vunpack.c.l.b16 %v15
  %v107 = vunpack.c.h.b16 %v15
  %v108 = vunpack.c.l.b16 %v16
  %v109 = vunpack.c.h.b16 %v16
  %v110 = vunpack.c.l.b16 %v17
  %v111 = vunpack.c.l.b16 %v18
  %v112 = vunpack.c.h.b16 %v18
  %v113 = vunpack.c.l.b16 %v19
  %v114 = vunpack.c.h.b16 %v19
  %v115 = vunpack.c.l.b16 %v20
  %v116 = vpack.c.b16 %v111, %v106
  %v117 = vpack.c.b16 %v112, %v107
  %v118 = vpack.c.b16 %v113, %v108
  %v119 = vpack.c.b16 %v114, %v109
  %v120 = vpack.c.b16 %v115, %v110
  %v197 = vunpack.c.l.b16 %v21
  %v198 = vunpack.c.l.b16 %v22
  %v199 = vunpack.c.l.b16 %v23
  %v200 = vunpack.c.l.b16 %v24
  %v201 = vunpack.c.l.b16 %v25
  %v202 = vunpack.c.l.b16 %v26
  %v203 = vunpack.c.l.b16 %v27
  %v204 = vunpack.c.l.b16 %v28
  %v205 = vunpack.c.l.b16 %v29
  %v206 = vunpack.c.l.b16 %v30
  %v207 = vunpack.c.l.b16 %v31
  %v208 = vunpack.c.l.b16 %v32
  %v209 = vunpack.c.l.b16 %v33
  %v210 = vunpack.c.l.b16 %v34
  %v211 = vunpack.c.l.b16 %v35
  %v212 = vunpack.c.l.b16 %v36
  %v213 = vunpack.c.l.b16 %v37
  %v214 = vunpack.c.l.b16 %v38
  %v215 = vunpack.c.l.b16 %v39
  %v216 = vunpack.c.l.b16 %v40
  %v217 = vunpack.c.l.b16 %v41
  %v218 = vunpack.c.l.b16 %v42
  %v219 = vunpack.c.l.b16 %v43
  %v220 = vunpack.c.l.b16 %v44
  %v221 = vunpack.c.l.b16 %v45
  %v222 = vunpack.c.l.b16 %v46
  %v223 = vunpack.c.l.b16 %v47
  %v224 = vunpack.c.l.b16 %v48
  %v225 = vunpack.c.l.b16 %v49
  %v226 = vunpack.c.l.b16 %v50
  %v227 = vunpack.c.l.b16 %v51
  %v228 = vunpack.c.l.b16 %v52
  %v229 = vunpack.c.l.b16 %v53
  %v230 = vunpack.c.l.b16 %v54
  %v231 = vunpack.c.l.b16 %v55
  %v232 = vunpack.c.l.b16 %v56
  %v233 = vunpack.c.l.b16 %v57
  %v234 = vunpack.c.l.b16 %v58
  %v235 = vunpack.c.l.b16 %v59
  %v236 = vunpack.c.l.b16 %v60
  %v237 = vunpack.c.l.b16 %v61
  %v238 = vunpack.c.l.b16 %v62
  %v239 = vunpack.c.l.b16 %v63
  %v240 = vunpack.c.l.b16 %v64
  %v241 = vunpack.c.l.b16 %v65
  %v242 = vunpack.c.l.b16 %v66
  %v243 = vunpack.c.l.b16 %v67
  %v244 = vunpack.c.l.b16 %v68
  %v245 = vunpack.c.l.b16 %v69
  %v246 = vunpack.c.l.b16 %v70
  %v247 = vunpack.c.l.b16 %v71
  %v248 = vunpack.c.l.b16 %v72
  %v249 = vunpack.c.l.b16 %v73
  %v250 = vunpack.c.l.b16 %v74
  %v251 = vunpack.c.l.b16 %v75
  %v252 = vunpack.c.l.b16 %v76
  %v253 = vunpack.c.l.b16 %v77
  %v254 = vunpack.c.l.b16 %v78
  %v255 = vunpack.c.l.b16 %v79
  %v256 = vunpack.c.l.b16 %v80
  %v257 = vunpack.c.l.b16 %v81
  %v258 = vunpack.c.l.b16 %v82
  %v259 = vunpack.c.l.b16 %v83
  %v260 = vunpack.c.l.b16 %v84
  %v261 = vunpack.c.l.b16 %v85
  %v262 = vunpack.c.l.b16 %v86
  %v263 = vunpack.c.l.b16 %v87
  %v264 = vunpack.c.l.b16 %v88
  %v265 = vunpack.c.l.b16 %v89
  %v266 = vunpack.c.l.b16 %v90
  %v267 = vunpack.c.l.b16 %v91
  %v268 = vunpack.c.l.b16 %v92
  %v269 = vpack.c.b16 %v198, %v197
  %v270 = vpack.c.b16 %v200, %v199
  %v271 = vpack.c.b16 %v202, %v201
  %v272 = vpack.c.b16 %v204, %v203
  %v273 = vpack.c.b16 %v206, %v205
  %v274 = vpack.c.b16 %v208, %v207
  %v275 = vpack.c.b16 %v210, %v209
  %v276 = vpack.c.b16 %v212, %v211
  %v277 = vpack.c.b16 %v214, %v213
  %v278 = vpack.c.b16 %v216, %v215
  %v279 = vpack.c.b16 %v218, %v217
  %v280 = vpack.c.b16 %v220, %v219
  %v281 = vpack.c.b16 %v222, %v221
  %v282 = vpack.c.b16 %v224, %v223
  %v283 = vpack.c.b16 %v226, %v225
  %v284 = vpack.c.b16 %v228, %v227
  %v285 = vpack.c.b16 %v230, %v229
  %v286 = vpack.c.b16 %v232, %v231
  %v287 = vpack.c.b16 %v234, %v233
  %v288 = vpack.c.b16 %v236, %v235
  %v289 = vpack.c.b16 %v238, %v237
  %v290 = vpack.c.b16 %v240, %v239
  %v291 = vpack.c.b16 %v242, %v241
  %v292 = vpack.c.b16 %v244, %v243
  %v293 = vpack.c.b16 %v246, %v245
  %v294 = vpack.c.b16 %v248, %v247
  %v295 = vpack.c.b16 %v250, %v249
  %v296 = vpack.c.b16 %v252, %v251
  %v297 = vpack.c.b16 %v254, %v253
  %v298 = vpack.c.b16 %v256, %v255
  %v299 = vpack.c.b16 %v258, %v257
  %v300 = vpack.c.b16 %v260, %v259
  %v301 = vpack.c.b16 %v262, %v261
  %v302 = vpack.c.b16 %v264, %v263
  %v303 = vpack.c.b16 %v266, %v265
  %v304 = vpack.c.b16 %v268, %v267
  %vm341 = vcmask 523264
  %v343 = vsel %vm341, %v120, 0
  %345 = vmatprep.subr.bf16.mxu0 0
  %346 = vmatpush1.bf16.msra.mxu0 %v269
  %347 = vmatprep.subr.bf16.mxu0 0
  %348 = vmatpush1.bf16.msra.mxu0 %v270
  %349 = vmatprep.subr.bf16.mxu0 0
  %350 = vmatpush1.bf16.msra.mxu0 %v271
  %351 = vmatprep.subr.bf16.mxu0 0
  %352 = vmatpush1.bf16.msra.mxu0 %v272
  %353 = vmatprep.subr.bf16.mxu0 0
  %354 = vmatpush1.bf16.msra.mxu0 %v273
  %355 = vmatprep.subr.bf16.mxu0 0
  %356 = vmatpush1.bf16.msra.mxu0 %v274
  %357 = vmatprep.subr.bf16.mxu0 0
  %358 = vmatpush1.bf16.msra.mxu0 %v275
  %359 = vmatprep.subr.bf16.mxu0 0
  %360 = vmatpush1.bf16.msra.mxu0 %v276
  %361 = vmatprep.subr.bf16.mxu0 0
  %362 = vmatpush1.bf16.msra.mxu0 %v277
  %363 = vmatprep.subr.bf16.mxu0 0
  %364 = vmatpush1.bf16.msra.mxu0 %v278
  %365 = vmatprep.subr.bf16.mxu0 0
  %366 = vmatpush1.bf16.msra.mxu0 %v279
  %367 = vmatprep.subr.bf16.mxu0 0
  %368 = vmatpush1.bf16.msra.mxu0 %v280
  %369 = vmatprep.subr.bf16.mxu0 0
  %370 = vmatpush1.bf16.msra.mxu0 %v281
  %371 = vmatprep.subr.bf16.mxu0 0
  %372 = vmatpush1.bf16.msra.mxu0 %v282
  %373 = vmatprep.subr.bf16.mxu0 0
  %374 = vmatpush1.bf16.msra.mxu0 %v283
  %375 = vmatprep.subr.bf16.mxu0 0
  %376 = vmatpush1.bf16.msra.mxu0 %v284
  %377 = vmatprep.mubr.bf16.mxu0 %v117
  %378 = vmatmul.mubr.bf16.gmra.mrb[0].mxu0 %v116
  %v379 = vpop.f32.mrb[0].mxu0
  %v380 = vadd.f32 %v98, %v379
  %v381 = vpop.f32.mrb[0].mxu0
  %v382 = vpop.f32.mrb[0].mxu0
  %v383 = vadd.f32 %v98, %v382
  %v384 = vpop.f32.mrb[0].mxu0
  %385 = vdwg.mxu0
  %386 = vmatprep.subr.bf16.mxu0 0
  %387 = vmatpush1.bf16.msra.mxu0 %v285
  %388 = vmatprep.subr.bf16.mxu0 0
  %389 = vmatpush1.bf16.msra.mxu0 %v286
  %390 = vmatprep.subr.bf16.mxu0 0
  %391 = vmatpush1.bf16.msra.mxu0 %v287
  %392 = vmatprep.subr.bf16.mxu0 0
  %393 = vmatpush1.bf16.msra.mxu0 %v288
  %394 = vmatprep.subr.bf16.mxu0 0
  %395 = vmatpush1.bf16.msra.mxu0 %v289
  %396 = vmatprep.subr.bf16.mxu0 0
  %397 = vmatpush1.bf16.msra.mxu0 %v290
  %398 = vmatprep.subr.bf16.mxu0 0
  %399 = vmatpush1.bf16.msra.mxu0 %v291
  %400 = vmatprep.subr.bf16.mxu0 0
  %401 = vmatpush1.bf16.msra.mxu0 %v292
  %402 = vmatprep.subr.bf16.mxu0 0
  %403 = vmatpush1.bf16.msra.mxu0 %v293
  %404 = vmatprep.subr.bf16.mxu0 0
  %405 = vmatpush1.bf16.msra.mxu0 %v294
  %406 = vmatprep.subr.bf16.mxu0 0
  %407 = vmatpush1.bf16.msra.mxu0 %v295
  %408 = vmatprep.subr.bf16.mxu0 0
  %409 = vmatpush1.bf16.msra.mxu0 %v296
  %410 = vmatprep.subr.bf16.mxu0 0
  %411 = vmatpush1.bf16.msra.mxu0 %v297
  %412 = vmatprep.subr.bf16.mxu0 0
  %413 = vmatpush1.bf16.msra.mxu0 %v298
  %414 = vmatprep.subr.bf16.mxu0 0
  %415 = vmatpush1.bf16.msra.mxu0 %v299
  %416 = vmatprep.subr.bf16.mxu0 0
  %417 = vmatpush1.bf16.msra.mxu0 %v300
  %418 = vmatprep.mubr.bf16.mxu0 %v119
  %419 = vmatmul.mubr.bf16.gmra.mrb[0].mxu0 %v118
  %v420 = vpop.f32.mrb[0].mxu0
  %v421 = vadd.f32 %v380, %v420
  %v422 = vpop.f32.mrb[0].mxu0
  %v423 = vpop.f32.mrb[0].mxu0
  %v424 = vadd.f32 %v383, %v423
  %v425 = vpop.f32.mrb[0].mxu0
  %426 = vdwg.mxu0
  %427 = vmatprep.subr.bf16.mxu0 0
  %428 = vmatpush1.bf16.msra.mxu0 %v301
  %429 = vmatprep.subr.bf16.mxu0 0
  %430 = vmatpush1.bf16.msra.mxu0 %v302
  %431 = vmatprep.subr.bf16.mxu0 0
  %432 = vmatpush1.bf16.msra.mxu0 %v303
  %433 = vmatprep.subr.bf16.mxu0 0
  %434 = vmatpush1.bf16.msra.mxu0 %v304
  %435 = vmatprep.subr.bf16.mxu0 0
  %436 = vmatpush1.bf16.msra.mxu0 0
  %437 = vmatprep.subr.bf16.mxu0 0
  %438 = vmatpush1.bf16.msra.mxu0 0
  %439 = vmatprep.subr.bf16.mxu0 0
  %440 = vmatpush1.bf16.msra.mxu0 0
  %441 = vmatprep.subr.bf16.mxu0 0
  %442 = vmatpush1.bf16.msra.mxu0 0
  %443 = vmatprep.subr.bf16.mxu0 0
  %444 = vmatpush1.bf16.msra.mxu0 0
  %445 = vmatprep.subr.bf16.mxu0 0
  %446 = vmatpush1.bf16.msra.mxu0 0
  %447 = vmatprep.subr.bf16.mxu0 0
  %448 = vmatpush1.bf16.msra.mxu0 0
  %449 = vmatprep.subr.bf16.mxu0 0
  %450 = vmatpush1.bf16.msra.mxu0 0
  %451 = vmatprep.subr.bf16.mxu0 0
  %452 = vmatpush1.bf16.msra.mxu0 0
  %453 = vmatprep.subr.bf16.mxu0 0
  %454 = vmatpush1.bf16.msra.mxu0 0
  %455 = vmatprep.subr.bf16.mxu0 0
  %456 = vmatpush1.bf16.msra.mxu0 0
  %457 = vmatprep.subr.bf16.mxu0 0
  %458 = vmatpush1.bf16.msra.mxu0 0
  %459 = vmatprep.mubr.bf16.mxu0 0
  %460 = vmatmul.mubr.bf16.gmra.mrb[0].mxu0 %v343
  %v461 = vpop.f32.mrb[0].mxu0
  %v462 = vadd.f32 %v421, %v461
  %v463 = vpop.f32.mrb[0].mxu0
  %v464 = vpop.f32.mrb[0].mxu0
  %v465 = vadd.f32 %v424, %v464
  %v466 = vpop.f32.mrb[0].mxu0
  %467 = vdwg.mxu0
  %v468 = vmax.f32 %v462, 0.0
  %v469 = vmax.f32 %v465, 0.0
  %v470 = vpack.c.bf16 %v469, %v468
  %v472 = vunpack.c.l.b16 %v470
  %v473 = vunpack.c.h.b16 %v470
  %v474 = vpack.c.b16 %v472, %v472
  %v475 = vpack.c.b16 %v473, %v473
  %478 = vst [vmem:[%s3] sm:$0xf] %v474
  %479 = vst [vmem:[%s3 + $0x4] sm:$0xf] %v475
  // Predicated region
  $region14: #{dqn_forward_pallas.7} parent=0 // pred_check
    _
  $region15: #{dqn_forward_pallas.7} parent=0 // pred_check_branch
    %481 = sbr.rel (0) target = $region17
  $region16: #{dqn_forward_pallas.7} parent=0 // pred_region
    _
  $region17: #{dqn_forward_pallas.7} parent=0 // pred_fallthru
    _
  // Predicated region
  $region18: #{dqn_forward_pallas.7} parent=0 // pred_check
    _
  $region19: #{dqn_forward_pallas.7} parent=0 // pred_check_branch
    %483 = sbr.rel (0) target = $region21
  $region20: #{dqn_forward_pallas.7} parent=0 // pred_region
    _
  $region21: #{dqn_forward_pallas.7} parent=0 // pred_fallthru
    _

// kernel: dqn_forward_pallas.9
$region0: #{dqn_forward_pallas.9}
  #allocation0 [shape = 'u32[]', space=smem, size = 0x4, offset = 0x4, fixed_abs, tag = 'smem constant byte address 0x4 - core index']
  #allocation1 [shape = 'u32[144,128]{1,0:T(1,128)}', space=vmem, size = 0x12000, scoped, tag = 'internal scratch']
  %s0 = inlined_call_operand.vmem [shape: bf16[16,512], index: 0, kind: input, shape index: {}]
  %s1 = inlined_call_operand.vmem [shape: bf16[512,128], index: 1, kind: input, shape index: {}]
  %s2 = inlined_call_operand.vmem [shape: f32[1,128], index: 2, kind: input, shape index: {}]
  %s3 = inlined_call_operand.vmem [shape: f32[16,128], index: 3, kind: output, shape index: {}]
  %s4 = sld [smem:[#allocation0]]
  $region22: #{dqn_forward_pallas.9} parent=0
    _
  %s6 = ssub.s32 1, %s4
  %s7 = scalar_select 0, %s6, %s4
  // Predicated region
  $region2: #{dqn_forward_pallas.9} parent=0 // pred_check
    _
  $region3: #{dqn_forward_pallas.9} parent=0 // pred_check_branch
    %9 = sbr.rel (0) target = $region5
  $region4: #{dqn_forward_pallas.9} parent=0 // pred_region
    _
  $region5: #{dqn_forward_pallas.9} parent=0 // pred_fallthru
    _
  // Predicated region
  $region6: #{dqn_forward_pallas.9} parent=0 // pred_check
    _
  $region7: #{dqn_forward_pallas.9} parent=0 // pred_check_branch
    %11 = sbr.rel (0) target = $region9
  $region8: #{dqn_forward_pallas.9} parent=0 // pred_region
    _
  $region9: #{dqn_forward_pallas.9} parent=0 // pred_fallthru
    _
  // Predicated region
  $region10: #{dqn_forward_pallas.9} parent=0 // pred_check
    _
  $region11: #{dqn_forward_pallas.9} parent=0 // pred_check_branch
    %13 = sbr.rel (0) target = $region13
  $region12: #{dqn_forward_pallas.9} parent=0 // pred_region
    _
  $region13: #{dqn_forward_pallas.9} parent=0 // pred_fallthru
    _
  %v15 = vld [vmem:[%s0] sm:$0xff]
  %v16 = vld [vmem:[%s0 + $0x8] sm:$0xff]
  %v17 = vld [vmem:[%s0 + $0x10] sm:$0xff]
  %v18 = vld [vmem:[%s0 + $0x18] sm:$0xff]
  %v19 = vld [vmem:[%s1] sm:$0xf]
  %v20 = vld [vmem:[%s1 + $0x4] sm:$0xf]
  %v21 = vld [vmem:[%s1 + $0x8] sm:$0xf]
  %v22 = vld [vmem:[%s1 + $0xc] sm:$0xf]
  %v23 = vld [vmem:[%s1 + $0x10] sm:$0xf]
  %v24 = vld [vmem:[%s1 + $0x14] sm:$0xf]
  %v25 = vld [vmem:[%s1 + $0x18] sm:$0xf]
  %v26 = vld [vmem:[%s1 + $0x1c] sm:$0xf]
  %v27 = vld [vmem:[%s1 + $0x20] sm:$0xf]
  %v28 = vld [vmem:[%s1 + $0x24] sm:$0xf]
  %v29 = vld [vmem:[%s1 + $0x28] sm:$0xf]
  %v30 = vld [vmem:[%s1 + $0x2c] sm:$0xf]
  %v31 = vld [vmem:[%s1 + $0x30] sm:$0xf]
  %v32 = vld [vmem:[%s1 + $0x34] sm:$0xf]
  %v33 = vld [vmem:[%s1 + $0x38] sm:$0xf]
  %v34 = vld [vmem:[%s1 + $0x3c] sm:$0xf]
  %v35 = vld [vmem:[%s1 + $0x40] sm:$0xf]
  %v36 = vld [vmem:[%s1 + $0x44] sm:$0xf]
  %v37 = vld [vmem:[%s1 + $0x48] sm:$0xf]
  %v38 = vld [vmem:[%s1 + $0x4c] sm:$0xf]
  %v39 = vld [vmem:[%s1 + $0x50] sm:$0xf]
  %v40 = vld [vmem:[%s1 + $0x54] sm:$0xf]
  %v41 = vld [vmem:[%s1 + $0x58] sm:$0xf]
  %v42 = vld [vmem:[%s1 + $0x5c] sm:$0xf]
  %v43 = vld [vmem:[%s1 + $0x60] sm:$0xf]
  %v44 = vld [vmem:[%s1 + $0x64] sm:$0xf]
  %v45 = vld [vmem:[%s1 + $0x68] sm:$0xf]
  %v46 = vld [vmem:[%s1 + $0x6c] sm:$0xf]
  %v47 = vld [vmem:[%s1 + $0x70] sm:$0xf]
  %v48 = vld [vmem:[%s1 + $0x74] sm:$0xf]
  %v49 = vld [vmem:[%s1 + $0x78] sm:$0xf]
  %v50 = vld [vmem:[%s1 + $0x7c] sm:$0xf]
  %v51 = vld [vmem:[%s1 + $0x80] sm:$0xf]
  %v52 = vld [vmem:[%s1 + $0x84] sm:$0xf]
  %v53 = vld [vmem:[%s1 + $0x88] sm:$0xf]
  %v54 = vld [vmem:[%s1 + $0x8c] sm:$0xf]
  %v55 = vld [vmem:[%s1 + $0x90] sm:$0xf]
  %v56 = vld [vmem:[%s1 + $0x94] sm:$0xf]
  %v57 = vld [vmem:[%s1 + $0x98] sm:$0xf]
  %v58 = vld [vmem:[%s1 + $0x9c] sm:$0xf]
  %v59 = vld [vmem:[%s1 + $0xa0] sm:$0xf]
  %v60 = vld [vmem:[%s1 + $0xa4] sm:$0xf]
  %v61 = vld [vmem:[%s1 + $0xa8] sm:$0xf]
  %v62 = vld [vmem:[%s1 + $0xac] sm:$0xf]
  %v63 = vld [vmem:[%s1 + $0xb0] sm:$0xf]
  %v64 = vld [vmem:[%s1 + $0xb4] sm:$0xf]
  %v65 = vld [vmem:[%s1 + $0xb8] sm:$0xf]
  %v66 = vld [vmem:[%s1 + $0xbc] sm:$0xf]
  %v67 = vld [vmem:[%s1 + $0xc0] sm:$0xf]
  %v68 = vld [vmem:[%s1 + $0xc4] sm:$0xf]
  %v69 = vld [vmem:[%s1 + $0xc8] sm:$0xf]
  %v70 = vld [vmem:[%s1 + $0xcc] sm:$0xf]
  %v71 = vld [vmem:[%s1 + $0xd0] sm:$0xf]
  %v72 = vld [vmem:[%s1 + $0xd4] sm:$0xf]
  %v73 = vld [vmem:[%s1 + $0xd8] sm:$0xf]
  %v74 = vld [vmem:[%s1 + $0xdc] sm:$0xf]
  %v75 = vld [vmem:[%s1 + $0xe0] sm:$0xf]
  %v76 = vld [vmem:[%s1 + $0xe4] sm:$0xf]
  %v77 = vld [vmem:[%s1 + $0xe8] sm:$0xf]
  %v78 = vld [vmem:[%s1 + $0xec] sm:$0xf]
  %v79 = vld [vmem:[%s1 + $0xf0] sm:$0xf]
  %v80 = vld [vmem:[%s1 + $0xf4] sm:$0xf]
  %v81 = vld [vmem:[%s1 + $0xf8] sm:$0xf]
  %v82 = vld [vmem:[%s1 + $0xfc] sm:$0xf]
  %v83 = vld [vmem:[%s2] sm:$0x1]
  %v85 = vlaneseq
  %v86 = vshrl.u32 %v85, 7
  %v87 = vsub.s32 0, %v86
  %v88 = vrot.slane %v83, %v87
  %v94 = vunpack.c.l.b16 %v15
  %v95 = vunpack.c.h.b16 %v15
  %v96 = vunpack.c.l.b16 %v16
  %v97 = vunpack.c.h.b16 %v16
  %v98 = vunpack.c.l.b16 %v17
  %v99 = vunpack.c.h.b16 %v17
  %v100 = vunpack.c.l.b16 %v18
  %v101 = vunpack.c.h.b16 %v18
  %v102 = vpack.c.b16 %v98, %v94
  %v103 = vpack.c.b16 %v99, %v95
  %v104 = vpack.c.b16 %v100, %v96
  %v105 = vpack.c.b16 %v101, %v97
  %v174 = vunpack.c.l.b16 %v19
  %v175 = vunpack.c.l.b16 %v20
  %v176 = vunpack.c.l.b16 %v21
  %v177 = vunpack.c.l.b16 %v22
  %v178 = vunpack.c.l.b16 %v23
  %v179 = vunpack.c.l.b16 %v24
  %v180 = vunpack.c.l.b16 %v25
  %v181 = vunpack.c.l.b16 %v26
  %v182 = vunpack.c.l.b16 %v27
  %v183 = vunpack.c.l.b16 %v28
  %v184 = vunpack.c.l.b16 %v29
  %v185 = vunpack.c.l.b16 %v30
  %v186 = vunpack.c.l.b16 %v31
  %v187 = vunpack.c.l.b16 %v32
  %v188 = vunpack.c.l.b16 %v33
  %v189 = vunpack.c.l.b16 %v34
  %v190 = vunpack.c.l.b16 %v35
  %v191 = vunpack.c.l.b16 %v36
  %v192 = vunpack.c.l.b16 %v37
  %v193 = vunpack.c.l.b16 %v38
  %v194 = vunpack.c.l.b16 %v39
  %v195 = vunpack.c.l.b16 %v40
  %v196 = vunpack.c.l.b16 %v41
  %v197 = vunpack.c.l.b16 %v42
  %v198 = vunpack.c.l.b16 %v43
  %v199 = vunpack.c.l.b16 %v44
  %v200 = vunpack.c.l.b16 %v45
  %v201 = vunpack.c.l.b16 %v46
  %v202 = vunpack.c.l.b16 %v47
  %v203 = vunpack.c.l.b16 %v48
  %v204 = vunpack.c.l.b16 %v49
  %v205 = vunpack.c.l.b16 %v50
  %v206 = vunpack.c.l.b16 %v51
  %v207 = vunpack.c.l.b16 %v52
  %v208 = vunpack.c.l.b16 %v53
  %v209 = vunpack.c.l.b16 %v54
  %v210 = vunpack.c.l.b16 %v55
  %v211 = vunpack.c.l.b16 %v56
  %v212 = vunpack.c.l.b16 %v57
  %v213 = vunpack.c.l.b16 %v58
  %v214 = vunpack.c.l.b16 %v59
  %v215 = vunpack.c.l.b16 %v60
  %v216 = vunpack.c.l.b16 %v61
  %v217 = vunpack.c.l.b16 %v62
  %v218 = vunpack.c.l.b16 %v63
  %v219 = vunpack.c.l.b16 %v64
  %v220 = vunpack.c.l.b16 %v65
  %v221 = vunpack.c.l.b16 %v66
  %v222 = vunpack.c.l.b16 %v67
  %v223 = vunpack.c.l.b16 %v68
  %v224 = vunpack.c.l.b16 %v69
  %v225 = vunpack.c.l.b16 %v70
  %v226 = vunpack.c.l.b16 %v71
  %v227 = vunpack.c.l.b16 %v72
  %v228 = vunpack.c.l.b16 %v73
  %v229 = vunpack.c.l.b16 %v74
  %v230 = vunpack.c.l.b16 %v75
  %v231 = vunpack.c.l.b16 %v76
  %v232 = vunpack.c.l.b16 %v77
  %v233 = vunpack.c.l.b16 %v78
  %v234 = vunpack.c.l.b16 %v79
  %v235 = vunpack.c.l.b16 %v80
  %v236 = vunpack.c.l.b16 %v81
  %v237 = vunpack.c.l.b16 %v82
  %v238 = vpack.c.b16 %v175, %v174
  %v239 = vpack.c.b16 %v177, %v176
  %v240 = vpack.c.b16 %v179, %v178
  %v241 = vpack.c.b16 %v181, %v180
  %v242 = vpack.c.b16 %v183, %v182
  %v243 = vpack.c.b16 %v185, %v184
  %v244 = vpack.c.b16 %v187, %v186
  %v245 = vpack.c.b16 %v189, %v188
  %v246 = vpack.c.b16 %v191, %v190
  %v247 = vpack.c.b16 %v193, %v192
  %v248 = vpack.c.b16 %v195, %v194
  %v249 = vpack.c.b16 %v197, %v196
  %v250 = vpack.c.b16 %v199, %v198
  %v251 = vpack.c.b16 %v201, %v200
  %v252 = vpack.c.b16 %v203, %v202
  %v253 = vpack.c.b16 %v205, %v204
  %v254 = vpack.c.b16 %v207, %v206
  %v255 = vpack.c.b16 %v209, %v208
  %v256 = vpack.c.b16 %v211, %v210
  %v257 = vpack.c.b16 %v213, %v212
  %v258 = vpack.c.b16 %v215, %v214
  %v259 = vpack.c.b16 %v217, %v216
  %v260 = vpack.c.b16 %v219, %v218
  %v261 = vpack.c.b16 %v221, %v220
  %v262 = vpack.c.b16 %v223, %v222
  %v263 = vpack.c.b16 %v225, %v224
  %v264 = vpack.c.b16 %v227, %v226
  %v265 = vpack.c.b16 %v229, %v228
  %v266 = vpack.c.b16 %v231, %v230
  %v267 = vpack.c.b16 %v233, %v232
  %v268 = vpack.c.b16 %v235, %v234
  %v269 = vpack.c.b16 %v237, %v236
  %302 = vmatprep.subr.bf16.mxu0 0
  %303 = vmatpush1.bf16.msra.mxu0 %v238
  %304 = vmatprep.subr.bf16.mxu0 0
  %305 = vmatpush1.bf16.msra.mxu0 %v239
  %306 = vmatprep.subr.bf16.mxu0 0
  %307 = vmatpush1.bf16.msra.mxu0 %v240
  %308 = vmatprep.subr.bf16.mxu0 0
  %309 = vmatpush1.bf16.msra.mxu0 %v241
  %310 = vmatprep.subr.bf16.mxu0 0
  %311 = vmatpush1.bf16.msra.mxu0 %v242
  %312 = vmatprep.subr.bf16.mxu0 0
  %313 = vmatpush1.bf16.msra.mxu0 %v243
  %314 = vmatprep.subr.bf16.mxu0 0
  %315 = vmatpush1.bf16.msra.mxu0 %v244
  %316 = vmatprep.subr.bf16.mxu0 0
  %317 = vmatpush1.bf16.msra.mxu0 %v245
  %318 = vmatprep.subr.bf16.mxu0 0
  %319 = vmatpush1.bf16.msra.mxu0 %v246
  %320 = vmatprep.subr.bf16.mxu0 0
  %321 = vmatpush1.bf16.msra.mxu0 %v247
  %322 = vmatprep.subr.bf16.mxu0 0
  %323 = vmatpush1.bf16.msra.mxu0 %v248
  %324 = vmatprep.subr.bf16.mxu0 0
  %325 = vmatpush1.bf16.msra.mxu0 %v249
  %326 = vmatprep.subr.bf16.mxu0 0
  %327 = vmatpush1.bf16.msra.mxu0 %v250
  %328 = vmatprep.subr.bf16.mxu0 0
  %329 = vmatpush1.bf16.msra.mxu0 %v251
  %330 = vmatprep.subr.bf16.mxu0 0
  %331 = vmatpush1.bf16.msra.mxu0 %v252
  %332 = vmatprep.subr.bf16.mxu0 0
  %333 = vmatpush1.bf16.msra.mxu0 %v253
  %334 = vmatprep.mubr.bf16.mxu0 %v103
  %335 = vmatmul.mubr.bf16.gmra.mrb[0].mxu0 %v102
  %v336 = vpop.f32.mrb[0].mxu0
  %v337 = vadd.f32 %v88, %v336
  %v338 = vpop.f32.mrb[0].mxu0
  %v339 = vpop.f32.mrb[0].mxu0
  %v340 = vadd.f32 %v88, %v339
  %v341 = vpop.f32.mrb[0].mxu0
  %342 = vdwg.mxu0
  %343 = vmatprep.subr.bf16.mxu0 0
  %344 = vmatpush1.bf16.msra.mxu0 %v254
  %345 = vmatprep.subr.bf16.mxu0 0
  %346 = vmatpush1.bf16.msra.mxu0 %v255
  %347 = vmatprep.subr.bf16.mxu0 0
  %348 = vmatpush1.bf16.msra.mxu0 %v256
  %349 = vmatprep.subr.bf16.mxu0 0
  %350 = vmatpush1.bf16.msra.mxu0 %v257
  %351 = vmatprep.subr.bf16.mxu0 0
  %352 = vmatpush1.bf16.msra.mxu0 %v258
  %353 = vmatprep.subr.bf16.mxu0 0
  %354 = vmatpush1.bf16.msra.mxu0 %v259
  %355 = vmatprep.subr.bf16.mxu0 0
  %356 = vmatpush1.bf16.msra.mxu0 %v260
  %357 = vmatprep.subr.bf16.mxu0 0
  %358 = vmatpush1.bf16.msra.mxu0 %v261
  %359 = vmatprep.subr.bf16.mxu0 0
  %360 = vmatpush1.bf16.msra.mxu0 %v262
  %361 = vmatprep.subr.bf16.mxu0 0
  %362 = vmatpush1.bf16.msra.mxu0 %v263
  %363 = vmatprep.subr.bf16.mxu0 0
  %364 = vmatpush1.bf16.msra.mxu0 %v264
  %365 = vmatprep.subr.bf16.mxu0 0
  %366 = vmatpush1.bf16.msra.mxu0 %v265
  %367 = vmatprep.subr.bf16.mxu0 0
  %368 = vmatpush1.bf16.msra.mxu0 %v266
  %369 = vmatprep.subr.bf16.mxu0 0
  %370 = vmatpush1.bf16.msra.mxu0 %v267
  %371 = vmatprep.subr.bf16.mxu0 0
  %372 = vmatpush1.bf16.msra.mxu0 %v268
  %373 = vmatprep.subr.bf16.mxu0 0
  %374 = vmatpush1.bf16.msra.mxu0 %v269
  %375 = vmatprep.mubr.bf16.mxu0 %v105
  %376 = vmatmul.mubr.bf16.gmra.mrb[0].mxu0 %v104
  %v377 = vpop.f32.mrb[0].mxu0
  %v378 = vadd.f32 %v337, %v377
  %v379 = vpop.f32.mrb[0].mxu0
  %v380 = vpop.f32.mrb[0].mxu0
  %v381 = vadd.f32 %v340, %v380
  %v382 = vpop.f32.mrb[0].mxu0
  %383 = vdwg.mxu0
  %384 = vst [vmem:[%s3] sm:$0xff] %v378
  %385 = vst [vmem:[%s3 + $0x8] sm:$0xff] %v381
  // Predicated region
  $region14: #{dqn_forward_pallas.9} parent=0 // pred_check
    _
  $region15: #{dqn_forward_pallas.9} parent=0 // pred_check_branch
    %387 = sbr.rel (0) target = $region17
  $region16: #{dqn_forward_pallas.9} parent=0 // pred_region
    _
  $region17: #{dqn_forward_pallas.9} parent=0 // pred_fallthru
    _
  // Predicated region
  $region18: #{dqn_forward_pallas.9} parent=0 // pred_check
    _
  $region19: #{dqn_forward_pallas.9} parent=0 // pred_check_branch
    %389 = sbr.rel (0) target = $region21
  $region20: #{dqn_forward_pallas.9} parent=0 // pred_region
    _
  $region21: #{dqn_forward_pallas.9} parent=0 // pred_fallthru
    _

</llo_original>
